<compile_context>
chip_gen: v7x
topology: tpu7x:2x2x1
jax: 0.10.0
libtpu: 0.0.40
codegen_flags: <defaults>
</compile_context>

<pallas_src>
import functools

import jax
import jax.numpy as jnp
import numpy as np
from jax import lax
from jax.experimental import pallas as pl
from jax.experimental.pallas import tpu as pltpu

EPS = 1e-5                      # BatchNorm3d default eps
_INV_SQRT2 = 0.7071067811865476


# ------------------------------------------------------------------ kernel 1 --
def _dw_conv_stats_kernel(*refs, K, H, W):
    """Depthwise conv3d ('same') for one (n, d) output depth slice, channels-last.

    refs = (x_0 ... x_{K-1},  w_ref, b_ref,  y_ref, st_ref)
      x_i   : (Hp, Wp, C) padded input depth slice (d + i)             [VMEM]
      w_ref : (K*K*K, C)  per-channel taps, row = kd*K*K + kh*K + kw   [VMEM]
      b_ref : (1, C)      depthwise conv bias                          [VMEM]
      y_ref : (H, W, C)   raw conv + bias output slice                 [VMEM]
      st_ref: (2, C)      per-n accumulated [sum, sum_of_squares]      [VMEM accumulator]
    """
    x_refs = refs[:K]
    w_ref, b_ref = refs[K], refs[K + 1]
    y_ref, st_ref = refs[K + 2], refs[K + 3]

    d = pl.program_id(1)
    C = y_ref.shape[-1]

    acc = jnp.zeros((H, W, C), jnp.float32)
    for i in range(K):                        # depth taps: one input ref each
        xi = x_refs[i][...]                   # (Hp, Wp, C)
        for k in range(K):                    # width taps: one sublane shift per (i, k)
            xk = xi[:, k:k + W, :]            # (Hp, W, C)
            for j in range(K):                # height taps: leading-dim slice (cheap)
                acc = acc + xk[j:j + H] * w_ref[i * K * K + j * K + k]
    acc = acc + b_ref[0]
    y_ref[...] = acc

    # accumulate per-channel batch statistics across the depth grid axis
    @pl.when(d == 0)
    def _init():
        st_ref[...] = jnp.zeros_like(st_ref)

    s = jnp.sum(acc, axis=(0, 1))[None, :]            # (1, C)
    ss = jnp.sum(acc * acc, axis=(0, 1))[None, :]     # (1, C)
    st_ref[0:1, :] = st_ref[0:1, :] + s
    st_ref[1:2, :] = st_ref[1:2, :] + ss


# ------------------------------------------------------------------ kernel 2 --
def _mlp_kernel(y_ref, skip_ref, w1_ref, b1_ref, w2_ref, b2_ref, o_ref):
    # y_ref/skip_ref: (tm, C); w1_ref: (C, 3C) (BN pre-folded); b1_ref: (1, 3C);
    # w2_ref: (3C, C); b2_ref: (1, C); o_ref: (tm, C)
    y = y_ref[...]
    h = jnp.dot(y, w1_ref[...], preferred_element_type=jnp.float32) + b1_ref[...]
    # exact (erf-based) GELU, matching torch.nn.GELU default
    g = 0.5 * h * (1.0 + lax.erf(h * _INV_SQRT2))
    out = jnp.dot(g, w2_ref[...], preferred_element_type=jnp.float32) + b2_ref[...]
    o_ref[...] = out + skip_ref[...]


# ------------------------------------------------------------------ wrapper ---
def conv_next_block(x, params, kernel_size=3, tm=512):
    dw_w, dw_b, gamma, beta, w1, b1, w2, b2 = params
    N, C, D, H, W = x.shape
    K = kernel_size
    assert K % 2 == 1, "only odd kernel sizes ('same' symmetric padding) supported"
    p = (K - 1) // 2
    C3 = w1.shape[0]  # up_factor * C

    x = x.astype(jnp.float32)
    # single layout transpose to channels-last; XLA fuses the halo pad into the same copy
    x_cl = jnp.transpose(x, (0, 2, 3, 4, 1))                        # (N, D, H, W, C)
    xp = jnp.pad(x_cl, ((0, 0), (p, p), (p, p), (p, p), (0, 0)))    # (N, Dp, Hp, Wp, C)
    Dp, Hp, Wp = D + 2 * p, H + 2 * p, W + 2 * p

    w_cl = jnp.transpose(dw_w.reshape(C, K * K * K)).astype(jnp.float32)   # (K^3, C)
    b_cl = dw_b.reshape(1, C).astype(jnp.float32)

    def x_spec(i):
        return pl.BlockSpec((None, None, Hp, Wp, C),
                            lambda n, d, i=i: (n, d + i, 0, 0, 0))

    # kernel 1: depthwise conv3d ('same') + per-channel stat accumulation,
    # grid over (batch, output depth slice)
    y_cl, stats = pl.pallas_call(
        functools.partial(_dw_conv_stats_kernel, K=K, H=H, W=W),
        out_shape=(jax.ShapeDtypeStruct((N, D, H, W, C), jnp.float32),
                   jax.ShapeDtypeStruct((N, 2, C), jnp.float32)),
        grid=(N, D),
        in_specs=[x_spec(i) for i in range(K)] + [
            pl.BlockSpec((K * K * K, C), lambda n, d: (0, 0)),
            pl.BlockSpec((1, C), lambda n, d: (0, 0)),
        ],
        out_specs=(
            pl.BlockSpec((None, None, H, W, C), lambda n, d: (n, d, 0, 0, 0)),
            pl.BlockSpec((None, 2, C), lambda n, d: (n, 0, 0)),
        ),
        compiler_params=pltpu.CompilerParams(
            dimension_semantics=("parallel", "arbitrary")),
    )(*([xp] * K), w_cl, b_cl)

    # ---- fold BatchNorm3d (batch stats, biased variance) into conv1 -------------
    cnt = jnp.float32(N * D * H * W)
    mean = jnp.sum(stats[:, 0, :], axis=0) / cnt                    # (C,)
    var = jnp.maximum(jnp.sum(stats[:, 1, :], axis=0) / cnt - mean * mean, 0.0)
    inv = lax.rsqrt(var + EPS)
    scale = gamma.astype(jnp.float32) * inv                         # (C,)
    shift = beta.astype(jnp.float32) - mean * scale                 # (C,)

    w1_2d = w1.reshape(C3, C).astype(jnp.float32)
    w2_2d = w2.reshape(C, C3).astype(jnp.float32)
    w1_mat = jnp.transpose(w1_2d * scale[None, :])                  # (C, 3C), BN folded
    b1_mat = (b1.astype(jnp.float32) + w1_2d @ shift).reshape(1, C3)
    w2_mat = jnp.transpose(w2_2d)                                   # (3C, C)
    b2_mat = b2.reshape(1, C).astype(jnp.float32)

    # ---- pointwise MLP + residual on the (M, C) channels-last slab --------------
    M = N * D * H * W
    y_mat = y_cl.reshape(M, C)          # free bitcast: y_cl is contiguous NDHWC
    skip_mat = x_cl.reshape(M, C)

    tm = min(tm, M)
    if tm < M:
        tm = max(8, (tm // 8) * 8)      # keep (tm, C) block sublane-aligned
    pad_m = (-M) % tm
    if pad_m:
        y_mat = jnp.pad(y_mat, ((0, pad_m), (0, 0)))
        skip_mat = jnp.pad(skip_mat, ((0, pad_m), (0, 0)))
    Mp = M + pad_m

    out_mat = pl.pallas_call(
        _mlp_kernel,
        out_shape=jax.ShapeDtypeStruct((Mp, C), jnp.float32),
        grid=(Mp // tm,),
        in_specs=[
            pl.BlockSpec((tm, C), lambda i: (i, 0)),
            pl.BlockSpec((tm, C), lambda i: (i, 0)),
            pl.BlockSpec((C, C3), lambda i: (0, 0)),
            pl.BlockSpec((1, C3), lambda i: (0, 0)),
            pl.BlockSpec((C3, C), lambda i: (0, 0)),
            pl.BlockSpec((1, C), lambda i: (0, 0)),
        ],
        out_specs=pl.BlockSpec((tm, C), lambda i: (i, 0)),
        input_output_aliases={0: 0},   # reuse the y slab's HBM buffer for the output
        compiler_params=pltpu.CompilerParams(dimension_semantics=("parallel",)),
    )(y_mat, skip_mat, w1_mat, b1_mat, w2_mat, b2_mat)

    out = out_mat[:M].reshape(N, D, H, W, C).transpose(0, 4, 1, 2, 3)
    return out.astype(x.dtype)


# ---------------------------------------------------------------- reference ---
def reference(x, params):
    dw_w, dw_b, gamma, beta, w1, b1, w2, b2 = params
    C = x.shape[1]
    C3 = w1.shape[0]
    y = lax.conv_general_dilated(
        x, dw_w, window_strides=(1, 1, 1), padding="SAME",
        dimension_numbers=("NCDHW", "OIDHW", "NCDHW"), feature_group_count=C)
    y = y + dw_b[None, :, None, None, None]
    mean = jnp.mean(y, axis=(0, 2, 3, 4), keepdims=True)
    var = jnp.mean((y - mean) ** 2, axis=(0, 2, 3, 4), keepdims=True)
    y = (y - mean) * lax.rsqrt(var + EPS) * gamma[None, :, None, None, None] \
        + beta[None, :, None, None, None]
    h = jnp.einsum("ncdhw,oc->nodhw", y, w1.reshape(C3, C)) + b1[None, :, None, None, None]
    g = 0.5 * h * (1.0 + lax.erf(h * _INV_SQRT2))
    out = jnp.einsum("ncdhw,oc->nodhw", g, w2.reshape(C, C3)) + b2[None, :, None, None, None]
    return out + x


if __name__ == "__main__":
    N, C, D, H, W = 2, 4, 8, 8, 8
    K, UP = 3, 3

    key = jax.random.PRNGKey(0)
    keys = jax.random.split(key, 9)
    dw_w = 0.1 * jax.random.normal(keys[0], (C, 1, K, K, K), jnp.float32)
    dw_b = 0.1 * jax.random.normal(keys[1], (C,), jnp.float32)
    gamma = 1.0 + 0.1 * jax.random.normal(keys[2], (C,), jnp.float32)
    beta = 0.1 * jax.random.normal(keys[3], (C,), jnp.float32)
    w1 = 0.2 * jax.random.normal(keys[4], (UP * C, C, 1, 1, 1), jnp.float32)
    b1 = 0.1 * jax.random.normal(keys[5], (UP * C,), jnp.float32)
    w2 = 0.2 * jax.random.normal(keys[6], (C, UP * C, 1, 1, 1), jnp.float32)
    b2 = 0.1 * jax.random.normal(keys[7], (C,), jnp.float32)
    x = jax.random.normal(keys[8], (N, C, D, H, W), jnp.float32)
    params = (dw_w, dw_b, gamma, beta, w1, b1, w2, b2)

    out = jax.block_until_ready(conv_next_block(x, params, kernel_size=K))
    ref = jax.block_until_ready(reference(x, params))
    assert out.shape == x.shape and out.dtype == jnp.float32
    np.testing.assert_allclose(np.asarray(out), np.asarray(ref), atol=2e-4, rtol=2e-4)
    print("KERNEL_OK")
</pallas_src>

<mosaic_0001>
module attributes {stable_mosaic.version = 11 : i64} {
  func.func @_dw_conv_stats_kernel(%arg0: i32, %arg1: i32, %arg2: memref<1x1x10x10x4xf32, #tpu.memory_space<vmem>>, %arg3: memref<1x1x10x10x4xf32, #tpu.memory_space<vmem>>, %arg4: memref<1x1x10x10x4xf32, #tpu.memory_space<vmem>>, %arg5: memref<27x4xf32, #tpu.memory_space<vmem>>, %arg6: memref<1x4xf32, #tpu.memory_space<vmem>>, %arg7: memref<1x1x8x8x4xf32, #tpu.memory_space<vmem>>, %arg8: memref<1x2x4xf32, #tpu.memory_space<vmem>>) attributes {dimension_semantics = [#tpu.dimension_semantics<parallel>, #tpu.dimension_semantics<arbitrary>], iteration_bounds = array<i64: 2, 8>, scalar_prefetch = 0 : i64, scratch_operands = 0 : i64, tpu.core_type = #tpu.core_type<tc>, window_params = [{transform_indices = @transform_0, window_bounds = array<i64: 1, 1, 10, 10, 4>}, {transform_indices = @transform_1, window_bounds = array<i64: 1, 1, 10, 10, 4>}, {transform_indices = @transform_2, window_bounds = array<i64: 1, 1, 10, 10, 4>}, {pipeline_mode = #tpu.pipeline_mode<synchronous>, transform_indices = @transform_3, window_bounds = array<i64: 27, 4>}, {pipeline_mode = #tpu.pipeline_mode<synchronous>, transform_indices = @transform_4, window_bounds = array<i64: 1, 4>}, {transform_indices = @transform_5, window_bounds = array<i64: 1, 1, 8, 8, 4>}, {transform_indices = @transform_6, window_bounds = array<i64: 1, 2, 4>}]} {
    %cst = arith.constant 0.000000e+00 : f32
    %0 = vector.broadcast %cst : f32 to vector<8x8x4xf32>
    %c0 = arith.constant 0 : index
    %c0_0 = arith.constant 0 : index
    %c0_1 = arith.constant 0 : index
    %c0_2 = arith.constant 0 : index
    %c0_3 = arith.constant 0 : index
    %1 = vector.load %arg2[%c0, %c0_0, %c0_1, %c0_2, %c0_3] : memref<1x1x10x10x4xf32, #tpu.memory_space<vmem>>, vector<1x1x10x10x4xf32>
    %2 = vector.shape_cast %1 : vector<1x1x10x10x4xf32> to vector<10x10x4xf32>
    %3 = vector.extract_strided_slice %2 {offsets = [0, 0, 0], sizes = [10, 8, 4], strides = [1, 1, 1]} : vector<10x10x4xf32> to vector<10x8x4xf32>
    %4 = vector.extract_strided_slice %3 {offsets = [0, 0, 0], sizes = [8, 8, 4], strides = [1, 1, 1]} : vector<10x8x4xf32> to vector<8x8x4xf32>
    %c0_4 = arith.constant 0 : index
    %c0_5 = arith.constant 0 : index
    %5 = vector.load %arg5[%c0_4, %c0_5] : memref<27x4xf32, #tpu.memory_space<vmem>>, vector<1x4xf32>
    %6 = vector.shape_cast %5 : vector<1x4xf32> to vector<4xf32>
    %7 = vector.shape_cast %6 : vector<4xf32> to vector<1x1x4xf32>
    %8 = vector.broadcast %7 : vector<1x1x4xf32> to vector<8x8x4xf32>
    %9 = arith.mulf %4, %8 : vector<8x8x4xf32>
    %10 = arith.addf %0, %9 : vector<8x8x4xf32>
    %11 = vector.extract_strided_slice %3 {offsets = [1, 0, 0], sizes = [8, 8, 4], strides = [1, 1, 1]} : vector<10x8x4xf32> to vector<8x8x4xf32>
    %c3 = arith.constant 3 : index
    %c0_6 = arith.constant 0 : index
    %12 = vector.load %arg5[%c3, %c0_6] : memref<27x4xf32, #tpu.memory_space<vmem>>, vector<1x4xf32>
    %13 = vector.shape_cast %12 : vector<1x4xf32> to vector<4xf32>
    %14 = vector.shape_cast %13 : vector<4xf32> to vector<1x1x4xf32>
    %15 = vector.broadcast %14 : vector<1x1x4xf32> to vector<8x8x4xf32>
    %16 = arith.mulf %11, %15 : vector<8x8x4xf32>
    %17 = arith.addf %10, %16 : vector<8x8x4xf32>
    %18 = vector.extract_strided_slice %3 {offsets = [2, 0, 0], sizes = [8, 8, 4], strides = [1, 1, 1]} : vector<10x8x4xf32> to vector<8x8x4xf32>
    %c6 = arith.constant 6 : index
    %c0_7 = arith.constant 0 : index
    %19 = vector.load %arg5[%c6, %c0_7] : memref<27x4xf32, #tpu.memory_space<vmem>>, vector<1x4xf32>
    %20 = vector.shape_cast %19 : vector<1x4xf32> to vector<4xf32>
    %21 = vector.shape_cast %20 : vector<4xf32> to vector<1x1x4xf32>
    %22 = vector.broadcast %21 : vector<1x1x4xf32> to vector<8x8x4xf32>
    %23 = arith.mulf %18, %22 : vector<8x8x4xf32>
    %24 = arith.addf %17, %23 : vector<8x8x4xf32>
    %25 = vector.extract_strided_slice %2 {offsets = [0, 1, 0], sizes = [10, 8, 4], strides = [1, 1, 1]} : vector<10x10x4xf32> to vector<10x8x4xf32>
    %26 = vector.extract_strided_slice %25 {offsets = [0, 0, 0], sizes = [8, 8, 4], strides = [1, 1, 1]} : vector<10x8x4xf32> to vector<8x8x4xf32>
    %c1 = arith.constant 1 : index
    %c0_8 = arith.constant 0 : index
    %27 = vector.load %arg5[%c1, %c0_8] : memref<27x4xf32, #tpu.memory_space<vmem>>, vector<1x4xf32>
    %28 = vector.shape_cast %27 : vector<1x4xf32> to vector<4xf32>
    %29 = vector.shape_cast %28 : vector<4xf32> to vector<1x1x4xf32>
    %30 = vector.broadcast %29 : vector<1x1x4xf32> to vector<8x8x4xf32>
    %31 = arith.mulf %26, %30 : vector<8x8x4xf32>
    %32 = arith.addf %24, %31 : vector<8x8x4xf32>
    %33 = vector.extract_strided_slice %25 {offsets = [1, 0, 0], sizes = [8, 8, 4], strides = [1, 1, 1]} : vector<10x8x4xf32> to vector<8x8x4xf32>
    %c4 = arith.constant 4 : index
    %c0_9 = arith.constant 0 : index
    %34 = vector.load %arg5[%c4, %c0_9] : memref<27x4xf32, #tpu.memory_space<vmem>>, vector<1x4xf32>
    %35 = vector.shape_cast %34 : vector<1x4xf32> to vector<4xf32>
    %36 = vector.shape_cast %35 : vector<4xf32> to vector<1x1x4xf32>
    %37 = vector.broadcast %36 : vector<1x1x4xf32> to vector<8x8x4xf32>
    %38 = arith.mulf %33, %37 : vector<8x8x4xf32>
    %39 = arith.addf %32, %38 : vector<8x8x4xf32>
    %40 = vector.extract_strided_slice %25 {offsets = [2, 0, 0], sizes = [8, 8, 4], strides = [1, 1, 1]} : vector<10x8x4xf32> to vector<8x8x4xf32>
    %c7 = arith.constant 7 : index
    %c0_10 = arith.constant 0 : index
    %41 = vector.load %arg5[%c7, %c0_10] : memref<27x4xf32, #tpu.memory_space<vmem>>, vector<1x4xf32>
    %42 = vector.shape_cast %41 : vector<1x4xf32> to vector<4xf32>
    %43 = vector.shape_cast %42 : vector<4xf32> to vector<1x1x4xf32>
    %44 = vector.broadcast %43 : vector<1x1x4xf32> to vector<8x8x4xf32>
    %45 = arith.mulf %40, %44 : vector<8x8x4xf32>
    %46 = arith.addf %39, %45 : vector<8x8x4xf32>
    %47 = vector.extract_strided_slice %2 {offsets = [0, 2, 0], sizes = [10, 8, 4], strides = [1, 1, 1]} : vector<10x10x4xf32> to vector<10x8x4xf32>
    %48 = vector.extract_strided_slice %47 {offsets = [0, 0, 0], sizes = [8, 8, 4], strides = [1, 1, 1]} : vector<10x8x4xf32> to vector<8x8x4xf32>
    %c2 = arith.constant 2 : index
    %c0_11 = arith.constant 0 : index
    %49 = vector.load %arg5[%c2, %c0_11] : memref<27x4xf32, #tpu.memory_space<vmem>>, vector<1x4xf32>
    %50 = vector.shape_cast %49 : vector<1x4xf32> to vector<4xf32>
    %51 = vector.shape_cast %50 : vector<4xf32> to vector<1x1x4xf32>
    %52 = vector.broadcast %51 : vector<1x1x4xf32> to vector<8x8x4xf32>
    %53 = arith.mulf %48, %52 : vector<8x8x4xf32>
    %54 = arith.addf %46, %53 : vector<8x8x4xf32>
    %55 = vector.extract_strided_slice %47 {offsets = [1, 0, 0], sizes = [8, 8, 4], strides = [1, 1, 1]} : vector<10x8x4xf32> to vector<8x8x4xf32>
    %c5 = arith.constant 5 : index
    %c0_12 = arith.constant 0 : index
    %56 = vector.load %arg5[%c5, %c0_12] : memref<27x4xf32, #tpu.memory_space<vmem>>, vector<1x4xf32>
    %57 = vector.shape_cast %56 : vector<1x4xf32> to vector<4xf32>
    %58 = vector.shape_cast %57 : vector<4xf32> to vector<1x1x4xf32>
    %59 = vector.broadcast %58 : vector<1x1x4xf32> to vector<8x8x4xf32>
    %60 = arith.mulf %55, %59 : vector<8x8x4xf32>
    %61 = arith.addf %54, %60 : vector<8x8x4xf32>
    %62 = vector.extract_strided_slice %47 {offsets = [2, 0, 0], sizes = [8, 8, 4], strides = [1, 1, 1]} : vector<10x8x4xf32> to vector<8x8x4xf32>
    %c8 = arith.constant 8 : index
    %c0_13 = arith.constant 0 : index
    %63 = vector.load %arg5[%c8, %c0_13] : memref<27x4xf32, #tpu.memory_space<vmem>>, vector<1x4xf32>
    %64 = vector.shape_cast %63 : vector<1x4xf32> to vector<4xf32>
    %65 = vector.shape_cast %64 : vector<4xf32> to vector<1x1x4xf32>
    %66 = vector.broadcast %65 : vector<1x1x4xf32> to vector<8x8x4xf32>
    %67 = arith.mulf %62, %66 : vector<8x8x4xf32>
    %68 = arith.addf %61, %67 : vector<8x8x4xf32>
    %c0_14 = arith.constant 0 : index
    %c0_15 = arith.constant 0 : index
    %c0_16 = arith.constant 0 : index
    %c0_17 = arith.constant 0 : index
    %c0_18 = arith.constant 0 : index
    %69 = vector.load %arg3[%c0_14, %c0_15, %c0_16, %c0_17, %c0_18] : memref<1x1x10x10x4xf32, #tpu.memory_space<vmem>>, vector<1x1x10x10x4xf32>
    %70 = vector.shape_cast %69 : vector<1x1x10x10x4xf32> to vector<10x10x4xf32>
    %71 = vector.extract_strided_slice %70 {offsets = [0, 0, 0], sizes = [10, 8, 4], strides = [1, 1, 1]} : vector<10x10x4xf32> to vector<10x8x4xf32>
    %72 = vector.extract_strided_slice %71 {offsets = [0, 0, 0], sizes = [8, 8, 4], strides = [1, 1, 1]} : vector<10x8x4xf32> to vector<8x8x4xf32>
    %c9 = arith.constant 9 : index
    %c0_19 = arith.constant 0 : index
    %73 = vector.load %arg5[%c9, %c0_19] : memref<27x4xf32, #tpu.memory_space<vmem>>, vector<1x4xf32>
    %74 = vector.shape_cast %73 : vector<1x4xf32> to vector<4xf32>
    %75 = vector.shape_cast %74 : vector<4xf32> to vector<1x1x4xf32>
    %76 = vector.broadcast %75 : vector<1x1x4xf32> to vector<8x8x4xf32>
    %77 = arith.mulf %72, %76 : vector<8x8x4xf32>
    %78 = arith.addf %68, %77 : vector<8x8x4xf32>
    %79 = vector.extract_strided_slice %71 {offsets = [1, 0, 0], sizes = [8, 8, 4], strides = [1, 1, 1]} : vector<10x8x4xf32> to vector<8x8x4xf32>
    %c12 = arith.constant 12 : index
    %c0_20 = arith.constant 0 : index
    %80 = vector.load %arg5[%c12, %c0_20] : memref<27x4xf32, #tpu.memory_space<vmem>>, vector<1x4xf32>
    %81 = vector.shape_cast %80 : vector<1x4xf32> to vector<4xf32>
    %82 = vector.shape_cast %81 : vector<4xf32> to vector<1x1x4xf32>
    %83 = vector.broadcast %82 : vector<1x1x4xf32> to vector<8x8x4xf32>
    %84 = arith.mulf %79, %83 : vector<8x8x4xf32>
    %85 = arith.addf %78, %84 : vector<8x8x4xf32>
    %86 = vector.extract_strided_slice %71 {offsets = [2, 0, 0], sizes = [8, 8, 4], strides = [1, 1, 1]} : vector<10x8x4xf32> to vector<8x8x4xf32>
    %c15 = arith.constant 15 : index
    %c0_21 = arith.constant 0 : index
    %87 = vector.load %arg5[%c15, %c0_21] : memref<27x4xf32, #tpu.memory_space<vmem>>, vector<1x4xf32>
    %88 = vector.shape_cast %87 : vector<1x4xf32> to vector<4xf32>
    %89 = vector.shape_cast %88 : vector<4xf32> to vector<1x1x4xf32>
    %90 = vector.broadcast %89 : vector<1x1x4xf32> to vector<8x8x4xf32>
    %91 = arith.mulf %86, %90 : vector<8x8x4xf32>
    %92 = arith.addf %85, %91 : vector<8x8x4xf32>
    %93 = vector.extract_strided_slice %70 {offsets = [0, 1, 0], sizes = [10, 8, 4], strides = [1, 1, 1]} : vector<10x10x4xf32> to vector<10x8x4xf32>
    %94 = vector.extract_strided_slice %93 {offsets = [0, 0, 0], sizes = [8, 8, 4], strides = [1, 1, 1]} : vector<10x8x4xf32> to vector<8x8x4xf32>
    %c10 = arith.constant 10 : index
    %c0_22 = arith.constant 0 : index
    %95 = vector.load %arg5[%c10, %c0_22] : memref<27x4xf32, #tpu.memory_space<vmem>>, vector<1x4xf32>
    %96 = vector.shape_cast %95 : vector<1x4xf32> to vector<4xf32>
    %97 = vector.shape_cast %96 : vector<4xf32> to vector<1x1x4xf32>
    %98 = vector.broadcast %97 : vector<1x1x4xf32> to vector<8x8x4xf32>
    %99 = arith.mulf %94, %98 : vector<8x8x4xf32>
    %100 = arith.addf %92, %99 : vector<8x8x4xf32>
    %101 = vector.extract_strided_slice %93 {offsets = [1, 0, 0], sizes = [8, 8, 4], strides = [1, 1, 1]} : vector<10x8x4xf32> to vector<8x8x4xf32>
    %c13 = arith.constant 13 : index
    %c0_23 = arith.constant 0 : index
    %102 = vector.load %arg5[%c13, %c0_23] : memref<27x4xf32, #tpu.memory_space<vmem>>, vector<1x4xf32>
    %103 = vector.shape_cast %102 : vector<1x4xf32> to vector<4xf32>
    %104 = vector.shape_cast %103 : vector<4xf32> to vector<1x1x4xf32>
    %105 = vector.broadcast %104 : vector<1x1x4xf32> to vector<8x8x4xf32>
    %106 = arith.mulf %101, %105 : vector<8x8x4xf32>
    %107 = arith.addf %100, %106 : vector<8x8x4xf32>
    %108 = vector.extract_strided_slice %93 {offsets = [2, 0, 0], sizes = [8, 8, 4], strides = [1, 1, 1]} : vector<10x8x4xf32> to vector<8x8x4xf32>
    %c16 = arith.constant 16 : index
    %c0_24 = arith.constant 0 : index
    %109 = vector.load %arg5[%c16, %c0_24] : memref<27x4xf32, #tpu.memory_space<vmem>>, vector<1x4xf32>
    %110 = vector.shape_cast %109 : vector<1x4xf32> to vector<4xf32>
    %111 = vector.shape_cast %110 : vector<4xf32> to vector<1x1x4xf32>
    %112 = vector.broadcast %111 : vector<1x1x4xf32> to vector<8x8x4xf32>
    %113 = arith.mulf %108, %112 : vector<8x8x4xf32>
    %114 = arith.addf %107, %113 : vector<8x8x4xf32>
    %115 = vector.extract_strided_slice %70 {offsets = [0, 2, 0], sizes = [10, 8, 4], strides = [1, 1, 1]} : vector<10x10x4xf32> to vector<10x8x4xf32>
    %116 = vector.extract_strided_slice %115 {offsets = [0, 0, 0], sizes = [8, 8, 4], strides = [1, 1, 1]} : vector<10x8x4xf32> to vector<8x8x4xf32>
    %c11 = arith.constant 11 : index
    %c0_25 = arith.constant 0 : index
    %117 = vector.load %arg5[%c11, %c0_25] : memref<27x4xf32, #tpu.memory_space<vmem>>, vector<1x4xf32>
    %118 = vector.shape_cast %117 : vector<1x4xf32> to vector<4xf32>
    %119 = vector.shape_cast %118 : vector<4xf32> to vector<1x1x4xf32>
    %120 = vector.broadcast %119 : vector<1x1x4xf32> to vector<8x8x4xf32>
    %121 = arith.mulf %116, %120 : vector<8x8x4xf32>
    %122 = arith.addf %114, %121 : vector<8x8x4xf32>
    %123 = vector.extract_strided_slice %115 {offsets = [1, 0, 0], sizes = [8, 8, 4], strides = [1, 1, 1]} : vector<10x8x4xf32> to vector<8x8x4xf32>
    %c14 = arith.constant 14 : index
    %c0_26 = arith.constant 0 : index
    %124 = vector.load %arg5[%c14, %c0_26] : memref<27x4xf32, #tpu.memory_space<vmem>>, vector<1x4xf32>
    %125 = vector.shape_cast %124 : vector<1x4xf32> to vector<4xf32>
    %126 = vector.shape_cast %125 : vector<4xf32> to vector<1x1x4xf32>
    %127 = vector.broadcast %126 : vector<1x1x4xf32> to vector<8x8x4xf32>
    %128 = arith.mulf %123, %127 : vector<8x8x4xf32>
    %129 = arith.addf %122, %128 : vector<8x8x4xf32>
    %130 = vector.extract_strided_slice %115 {offsets = [2, 0, 0], sizes = [8, 8, 4], strides = [1, 1, 1]} : vector<10x8x4xf32> to vector<8x8x4xf32>
    %c17 = arith.constant 17 : index
    %c0_27 = arith.constant 0 : index
    %131 = vector.load %arg5[%c17, %c0_27] : memref<27x4xf32, #tpu.memory_space<vmem>>, vector<1x4xf32>
    %132 = vector.shape_cast %131 : vector<1x4xf32> to vector<4xf32>
    %133 = vector.shape_cast %132 : vector<4xf32> to vector<1x1x4xf32>
    %134 = vector.broadcast %133 : vector<1x1x4xf32> to vector<8x8x4xf32>
    %135 = arith.mulf %130, %134 : vector<8x8x4xf32>
    %136 = arith.addf %129, %135 : vector<8x8x4xf32>
    %c0_28 = arith.constant 0 : index
    %c0_29 = arith.constant 0 : index
    %c0_30 = arith.constant 0 : index
    %c0_31 = arith.constant 0 : index
    %c0_32 = arith.constant 0 : index
    %137 = vector.load %arg4[%c0_28, %c0_29, %c0_30, %c0_31, %c0_32] : memref<1x1x10x10x4xf32, #tpu.memory_space<vmem>>, vector<1x1x10x10x4xf32>
    %138 = vector.shape_cast %137 : vector<1x1x10x10x4xf32> to vector<10x10x4xf32>
    %139 = vector.extract_strided_slice %138 {offsets = [0, 0, 0], sizes = [10, 8, 4], strides = [1, 1, 1]} : vector<10x10x4xf32> to vector<10x8x4xf32>
    %140 = vector.extract_strided_slice %139 {offsets = [0, 0, 0], sizes = [8, 8, 4], strides = [1, 1, 1]} : vector<10x8x4xf32> to vector<8x8x4xf32>
    %c18 = arith.constant 18 : index
    %c0_33 = arith.constant 0 : index
    %141 = vector.load %arg5[%c18, %c0_33] : memref<27x4xf32, #tpu.memory_space<vmem>>, vector<1x4xf32>
    %142 = vector.shape_cast %141 : vector<1x4xf32> to vector<4xf32>
    %143 = vector.shape_cast %142 : vector<4xf32> to vector<1x1x4xf32>
    %144 = vector.broadcast %143 : vector<1x1x4xf32> to vector<8x8x4xf32>
    %145 = arith.mulf %140, %144 : vector<8x8x4xf32>
    %146 = arith.addf %136, %145 : vector<8x8x4xf32>
    %147 = vector.extract_strided_slice %139 {offsets = [1, 0, 0], sizes = [8, 8, 4], strides = [1, 1, 1]} : vector<10x8x4xf32> to vector<8x8x4xf32>
    %c21 = arith.constant 21 : index
    %c0_34 = arith.constant 0 : index
    %148 = vector.load %arg5[%c21, %c0_34] : memref<27x4xf32, #tpu.memory_space<vmem>>, vector<1x4xf32>
    %149 = vector.shape_cast %148 : vector<1x4xf32> to vector<4xf32>
    %150 = vector.shape_cast %149 : vector<4xf32> to vector<1x1x4xf32>
    %151 = vector.broadcast %150 : vector<1x1x4xf32> to vector<8x8x4xf32>
    %152 = arith.mulf %147, %151 : vector<8x8x4xf32>
    %153 = arith.addf %146, %152 : vector<8x8x4xf32>
    %154 = vector.extract_strided_slice %139 {offsets = [2, 0, 0], sizes = [8, 8, 4], strides = [1, 1, 1]} : vector<10x8x4xf32> to vector<8x8x4xf32>
    %c24 = arith.constant 24 : index
    %c0_35 = arith.constant 0 : index
    %155 = vector.load %arg5[%c24, %c0_35] : memref<27x4xf32, #tpu.memory_space<vmem>>, vector<1x4xf32>
    %156 = vector.shape_cast %155 : vector<1x4xf32> to vector<4xf32>
    %157 = vector.shape_cast %156 : vector<4xf32> to vector<1x1x4xf32>
    %158 = vector.broadcast %157 : vector<1x1x4xf32> to vector<8x8x4xf32>
    %159 = arith.mulf %154, %158 : vector<8x8x4xf32>
    %160 = arith.addf %153, %159 : vector<8x8x4xf32>
    %161 = vector.extract_strided_slice %138 {offsets = [0, 1, 0], sizes = [10, 8, 4], strides = [1, 1, 1]} : vector<10x10x4xf32> to vector<10x8x4xf32>
    %162 = vector.extract_strided_slice %161 {offsets = [0, 0, 0], sizes = [8, 8, 4], strides = [1, 1, 1]} : vector<10x8x4xf32> to vector<8x8x4xf32>
    %c19 = arith.constant 19 : index
    %c0_36 = arith.constant 0 : index
    %163 = vector.load %arg5[%c19, %c0_36] : memref<27x4xf32, #tpu.memory_space<vmem>>, vector<1x4xf32>
    %164 = vector.shape_cast %163 : vector<1x4xf32> to vector<4xf32>
    %165 = vector.shape_cast %164 : vector<4xf32> to vector<1x1x4xf32>
    %166 = vector.broadcast %165 : vector<1x1x4xf32> to vector<8x8x4xf32>
    %167 = arith.mulf %162, %166 : vector<8x8x4xf32>
    %168 = arith.addf %160, %167 : vector<8x8x4xf32>
    %169 = vector.extract_strided_slice %161 {offsets = [1, 0, 0], sizes = [8, 8, 4], strides = [1, 1, 1]} : vector<10x8x4xf32> to vector<8x8x4xf32>
    %c22 = arith.constant 22 : index
    %c0_37 = arith.constant 0 : index
    %170 = vector.load %arg5[%c22, %c0_37] : memref<27x4xf32, #tpu.memory_space<vmem>>, vector<1x4xf32>
    %171 = vector.shape_cast %170 : vector<1x4xf32> to vector<4xf32>
    %172 = vector.shape_cast %171 : vector<4xf32> to vector<1x1x4xf32>
    %173 = vector.broadcast %172 : vector<1x1x4xf32> to vector<8x8x4xf32>
    %174 = arith.mulf %169, %173 : vector<8x8x4xf32>
    %175 = arith.addf %168, %174 : vector<8x8x4xf32>
    %176 = vector.extract_strided_slice %161 {offsets = [2, 0, 0], sizes = [8, 8, 4], strides = [1, 1, 1]} : vector<10x8x4xf32> to vector<8x8x4xf32>
    %c25 = arith.constant 25 : index
    %c0_38 = arith.constant 0 : index
    %177 = vector.load %arg5[%c25, %c0_38] : memref<27x4xf32, #tpu.memory_space<vmem>>, vector<1x4xf32>
    %178 = vector.shape_cast %177 : vector<1x4xf32> to vector<4xf32>
    %179 = vector.shape_cast %178 : vector<4xf32> to vector<1x1x4xf32>
    %180 = vector.broadcast %179 : vector<1x1x4xf32> to vector<8x8x4xf32>
    %181 = arith.mulf %176, %180 : vector<8x8x4xf32>
    %182 = arith.addf %175, %181 : vector<8x8x4xf32>
    %183 = vector.extract_strided_slice %138 {offsets = [0, 2, 0], sizes = [10, 8, 4], strides = [1, 1, 1]} : vector<10x10x4xf32> to vector<10x8x4xf32>
    %184 = vector.extract_strided_slice %183 {offsets = [0, 0, 0], sizes = [8, 8, 4], strides = [1, 1, 1]} : vector<10x8x4xf32> to vector<8x8x4xf32>
    %c20 = arith.constant 20 : index
    %c0_39 = arith.constant 0 : index
    %185 = vector.load %arg5[%c20, %c0_39] : memref<27x4xf32, #tpu.memory_space<vmem>>, vector<1x4xf32>
    %186 = vector.shape_cast %185 : vector<1x4xf32> to vector<4xf32>
    %187 = vector.shape_cast %186 : vector<4xf32> to vector<1x1x4xf32>
    %188 = vector.broadcast %187 : vector<1x1x4xf32> to vector<8x8x4xf32>
    %189 = arith.mulf %184, %188 : vector<8x8x4xf32>
    %190 = arith.addf %182, %189 : vector<8x8x4xf32>
    %191 = vector.extract_strided_slice %183 {offsets = [1, 0, 0], sizes = [8, 8, 4], strides = [1, 1, 1]} : vector<10x8x4xf32> to vector<8x8x4xf32>
    %c23 = arith.constant 23 : index
    %c0_40 = arith.constant 0 : index
    %192 = vector.load %arg5[%c23, %c0_40] : memref<27x4xf32, #tpu.memory_space<vmem>>, vector<1x4xf32>
    %193 = vector.shape_cast %192 : vector<1x4xf32> to vector<4xf32>
    %194 = vector.shape_cast %193 : vector<4xf32> to vector<1x1x4xf32>
    %195 = vector.broadcast %194 : vector<1x1x4xf32> to vector<8x8x4xf32>
    %196 = arith.mulf %191, %195 : vector<8x8x4xf32>
    %197 = arith.addf %190, %196 : vector<8x8x4xf32>
    %198 = vector.extract_strided_slice %183 {offsets = [2, 0, 0], sizes = [8, 8, 4], strides = [1, 1, 1]} : vector<10x8x4xf32> to vector<8x8x4xf32>
    %c26 = arith.constant 26 : index
    %c0_41 = arith.constant 0 : index
    %199 = vector.load %arg5[%c26, %c0_41] : memref<27x4xf32, #tpu.memory_space<vmem>>, vector<1x4xf32>
    %200 = vector.shape_cast %199 : vector<1x4xf32> to vector<4xf32>
    %201 = vector.shape_cast %200 : vector<4xf32> to vector<1x1x4xf32>
    %202 = vector.broadcast %201 : vector<1x1x4xf32> to vector<8x8x4xf32>
    %203 = arith.mulf %198, %202 : vector<8x8x4xf32>
    %204 = arith.addf %197, %203 : vector<8x8x4xf32>
    %c0_42 = arith.constant 0 : index
    %c0_43 = arith.constant 0 : index
    %205 = vector.load %arg6[%c0_42, %c0_43] : memref<1x4xf32, #tpu.memory_space<vmem>>, vector<1x4xf32>
    %206 = vector.shape_cast %205 : vector<1x4xf32> to vector<4xf32>
    %207 = vector.shape_cast %206 : vector<4xf32> to vector<1x1x4xf32>
    %208 = vector.broadcast %207 : vector<1x1x4xf32> to vector<8x8x4xf32>
    %209 = arith.addf %204, %208 : vector<8x8x4xf32>
    %c0_44 = arith.constant 0 : index
    %c0_45 = arith.constant 0 : index
    %c0_46 = arith.constant 0 : index
    %c0_47 = arith.constant 0 : index
    %c0_48 = arith.constant 0 : index
    %210 = vector.load %arg7[%c0_44, %c0_45, %c0_46, %c0_47, %c0_48] : memref<1x1x8x8x4xf32, #tpu.memory_space<vmem>>, vector<1x1x8x8x4xf32>
    %211 = vector.shape_cast %210 : vector<1x1x8x8x4xf32> to vector<8x8x4xf32>
    %212 = vector.shape_cast %209 : vector<8x8x4xf32> to vector<1x1x8x8x4xf32>
    tpu.vector_store %arg7[%c0_44, %c0_45, %c0_46, %c0_47, %c0_48], %212 {strides = array<i32>} : memref<1x1x8x8x4xf32, #tpu.memory_space<vmem>>, vector<1x1x8x8x4xf32>,
    %c0_i32 = arith.constant 0 : i32
    %213 = arith.cmpi eq, %arg1, %c0_i32 : i32
    %214 = arith.extui %213 : i1 to i32
    %c0_i32_49 = arith.constant 0 : i32
    %215 = arith.cmpi ne, %214, %c0_i32_49 : i32
    scf.if %215 {
      %cst_64 = arith.constant 0.000000e+00 : f32
      %233 = vector.broadcast %cst_64 : f32 to vector<2x4xf32>
      %c0_65 = arith.constant 0 : index
      %c0_66 = arith.constant 0 : index
      %c0_67 = arith.constant 0 : index
      %234 = vector.load %arg8[%c0_65, %c0_66, %c0_67] : memref<1x2x4xf32, #tpu.memory_space<vmem>>, vector<1x2x4xf32>
      %235 = vector.shape_cast %234 : vector<1x2x4xf32> to vector<2x4xf32>
      %236 = vector.shape_cast %233 : vector<2x4xf32> to vector<1x2x4xf32>
      tpu.vector_store %arg8[%c0_65, %c0_66, %c0_67], %236 {strides = array<i32>} : memref<1x2x4xf32, #tpu.memory_space<vmem>>, vector<1x2x4xf32>,
    } else {
    }
    %cst_50 = arith.constant dense<0.000000e+00> : vector<4xf32>
    %216 = vector.multi_reduction <add>, %209, %cst_50 [0, 1] : vector<8x8x4xf32> to vector<4xf32>
    %217 = vector.shape_cast %216 : vector<4xf32> to vector<1x4xf32>
    %218 = arith.mulf %209, %209 : vector<8x8x4xf32>
    %cst_51 = arith.constant dense<0.000000e+00> : vector<4xf32>
    %219 = vector.multi_reduction <add>, %218, %cst_51 [0, 1] : vector<8x8x4xf32> to vector<4xf32>
    %220 = vector.shape_cast %219 : vector<4xf32> to vector<1x4xf32>
    %c0_52 = arith.constant 0 : index
    %c0_53 = arith.constant 0 : index
    %c0_54 = arith.constant 0 : index
    %221 = vector.load %arg8[%c0_52, %c0_53, %c0_54] : memref<1x2x4xf32, #tpu.memory_space<vmem>>, vector<1x1x4xf32>
    %222 = vector.shape_cast %221 : vector<1x1x4xf32> to vector<1x4xf32>
    %223 = arith.addf %222, %217 : vector<1x4xf32>
    %c0_55 = arith.constant 0 : index
    %c0_56 = arith.constant 0 : index
    %c0_57 = arith.constant 0 : index
    %224 = vector.load %arg8[%c0_55, %c0_56, %c0_57] : memref<1x2x4xf32, #tpu.memory_space<vmem>>, vector<1x1x4xf32>
    %225 = vector.shape_cast %224 : vector<1x1x4xf32> to vector<1x4xf32>
    %226 = vector.shape_cast %223 : vector<1x4xf32> to vector<1x1x4xf32>
    tpu.vector_store %arg8[%c0_55, %c0_56, %c0_57], %226 {strides = array<i32>} : memref<1x2x4xf32, #tpu.memory_space<vmem>>, vector<1x1x4xf32>,
    %c0_58 = arith.constant 0 : index
    %c1_59 = arith.constant 1 : index
    %c0_60 = arith.constant 0 : index
    %227 = vector.load %arg8[%c0_58, %c1_59, %c0_60] : memref<1x2x4xf32, #tpu.memory_space<vmem>>, vector<1x1x4xf32>
    %228 = vector.shape_cast %227 : vector<1x1x4xf32> to vector<1x4xf32>
    %229 = arith.addf %228, %220 : vector<1x4xf32>
    %c0_61 = arith.constant 0 : index
    %c1_62 = arith.constant 1 : index
    %c0_63 = arith.constant 0 : index
    %230 = vector.load %arg8[%c0_61, %c1_62, %c0_63] : memref<1x2x4xf32, #tpu.memory_space<vmem>>, vector<1x1x4xf32>
    %231 = vector.shape_cast %230 : vector<1x1x4xf32> to vector<1x4xf32>
    %232 = vector.shape_cast %229 : vector<1x4xf32> to vector<1x1x4xf32>
    tpu.vector_store %arg8[%c0_61, %c1_62, %c0_63], %232 {strides = array<i32>} : memref<1x2x4xf32, #tpu.memory_space<vmem>>, vector<1x1x4xf32>,
    return
  }
  func.func @transform_0(%arg0: i32, %arg1: i32) -> (i32, i32, i32, i32, i32) {
    %c0_i32 = arith.constant 0 : i32
    %0 = arith.addi %arg1, %c0_i32 : i32
    %c0_i32_0 = arith.constant 0 : i32
    %c0_i32_1 = arith.constant 0 : i32
    %c0_i32_2 = arith.constant 0 : i32
    %c0_i32_3 = arith.constant 0 : i32
    return %arg0, %0, %c0_i32_0, %c0_i32_1, %c0_i32_2 : i32, i32, i32, i32, i32
  }
  func.func @transform_1(%arg0: i32, %arg1: i32) -> (i32, i32, i32, i32, i32) {
    %c1_i32 = arith.constant 1 : i32
    %0 = arith.addi %arg1, %c1_i32 : i32
    %c0_i32 = arith.constant 0 : i32
    %c0_i32_0 = arith.constant 0 : i32
    %c0_i32_1 = arith.constant 0 : i32
    %c0_i32_2 = arith.constant 0 : i32
    return %arg0, %0, %c0_i32, %c0_i32_0, %c0_i32_1 : i32, i32, i32, i32, i32
  }
  func.func @transform_2(%arg0: i32, %arg1: i32) -> (i32, i32, i32, i32, i32) {
    %c2_i32 = arith.constant 2 : i32
    %0 = arith.addi %arg1, %c2_i32 : i32
    %c0_i32 = arith.constant 0 : i32
    %c0_i32_0 = arith.constant 0 : i32
    %c0_i32_1 = arith.constant 0 : i32
    %c0_i32_2 = arith.constant 0 : i32
    return %arg0, %0, %c0_i32, %c0_i32_0, %c0_i32_1 : i32, i32, i32, i32, i32
  }
  func.func @transform_3(%arg0: i32, %arg1: i32) -> (i32, i32) {
    %c0_i32 = arith.constant 0 : i32
    %c0_i32_0 = arith.constant 0 : i32
    %c0_i32_1 = arith.constant 0 : i32
    return %c0_i32, %c0_i32_0 : i32, i32
  }
  func.func @transform_4(%arg0: i32, %arg1: i32) -> (i32, i32) {
    %c0_i32 = arith.constant 0 : i32
    %c0_i32_0 = arith.constant 0 : i32
    %c0_i32_1 = arith.constant 0 : i32
    return %c0_i32, %c0_i32_0 : i32, i32
  }
  func.func @transform_5(%arg0: i32, %arg1: i32) -> (i32, i32, i32, i32, i32) {
    %c0_i32 = arith.constant 0 : i32
    %c0_i32_0 = arith.constant 0 : i32
    %c0_i32_1 = arith.constant 0 : i32
    %c0_i32_2 = arith.constant 0 : i32
    return %arg0, %arg1, %c0_i32, %c0_i32_0, %c0_i32_1 : i32, i32, i32, i32, i32
  }
  func.func @transform_6(%arg0: i32, %arg1: i32) -> (i32, i32, i32) {
    %c0_i32 = arith.constant 0 : i32
    %c0_i32_0 = arith.constant 0 : i32
    %c0_i32_1 = arith.constant 0 : i32
    return %arg0, %c0_i32, %c0_i32_0 : i32, i32, i32
  }
}

</mosaic_0001>

<llo_original>
// kernel: tpu_custom_call.1
$region0: #{tpu_custom_call.1}
  #allocation0 [shape = 'u32[]', space=smem, size = 0x4, offset = 0x4, fixed_abs, tag = 'smem constant byte address 0x4 - core index']
  #allocation1 [shape = 'u32[144,128]{1,0:T(1,128)}', space=vmem, size = 0x12000, scoped, tag = 'internal scratch']
  %s0 = inlined_call_operand.vmem [shape: f32[2,10,10,10,4], index: 0, kind: input, shape index: {}]
  %s1 = inlined_call_operand.vmem [shape: f32[2,10,10,10,4], index: 1, kind: input, shape index: {}]
  %s2 = inlined_call_operand.vmem [shape: f32[2,10,10,10,4], index: 2, kind: input, shape index: {}]
  %s3 = inlined_call_operand.vmem [shape: f32[27,4], index: 3, kind: input, shape index: {}]
  %s4 = inlined_call_operand.vmem [shape: f32[1,4], index: 4, kind: input, shape index: {}]
  %s5 = inlined_call_operand.vmem [shape: f32[2,8,8,8,4], index: 5, kind: output, shape index: {0}]
  %s6 = inlined_call_operand.hbm [shape: f32[2,2,4], index: 6, kind: output, shape index: {1}]
  %7 = xla_tuple %s5, %s6
  %s8 = sld [smem:[#allocation0]]
  $region65: #{tpu_custom_call.1} parent=0
    _
  %s10 = ssub.s32 1, %s8
  %s11 = scalar_select 0, %s10, %s8
  $region1: #{tpu_custom_call.1} parent=0
    #allocation2 [shape = 'u8[2048]{0}', space=vmem, size = 0x800, scoped, tag = 'output window, operand 1']
    #allocation3 [shape = 's32[2]{0}', space=sflag, size = 0x8, scoped, tag = 'scoped memory for tpu_custom_call.1']
    %12 = vsyncpa [#allocation3], 0
    %s13 = scalar_lea.sflag [#allocation3], 1
    %14 = vsyncpa %s13, 0
    loop: start=0, step=1, limit=18
    $region2: #{tpu_custom_call.1} parent=1 // loop_pre_header
      _
    $region3: #{tpu_custom_call.1} parent=1 // loop_header
      %s16 = sphi 0, %s20
      %p17 = scmp.ge.s32.totalorder %s16, 18
      %s23 = sphi 0, %s35
      %s24 = sphi 0, %s31
      %s25 = sphi 0, %s23
      %s26 = sphi 0, %s24
      %s27 = sphi 0, %s25
      %s28 = sphi 0, %s26
      %s40 = sphi 0, %s42
      %s43 = sphi 0, %s40
      %s44 = sphi 0, %s43
      %s60 = sphi 0, %s44
      %s70 = sphi 0, %s72
      %s73 = sphi 0, %s70
      %s74 = sphi 0, %s73
      %s90 = sphi 0, %s74
      %s100 = sphi 0, %s102
      %s103 = sphi 0, %s100
      %s104 = sphi 0, %s103
      %s120 = sphi 0, %s104
      %s124 = sphi 0, %s124
      %s126 = sphi 0, %s124
      %s127 = sphi 0, %s126
      %s141 = sphi 0, %s127
      %s145 = sphi 0, %s145
      %s147 = sphi 0, %s145
      %s148 = sphi 0, %s147
      %s162 = sphi 0, %s148
      %s170 = sphi 0, %s172
      %s173 = sphi 0, %s170
      %s174 = sphi 0, %s173
      %s190 = sphi 0, %s174
      %s196 = sphi 0, %s198
      %s199 = sphi 0, %s196
      %s200 = sphi 0, %s199
      %s216 = sphi 0, %s200
    $region4: #{tpu_custom_call.1} parent=1 // loop_header_branch
      %19 = sbr.rel (%p17) target = $region8
    $region5: #{tpu_custom_call.1} parent=1 // loop_body
      %s21 = ssub.s32 %s16, 1
      %s22 = ssub.s32 %s16, 2
      %s29 = sadd.s32 1, %s24
      %p30 = scmp.ge.s32.totalorder %s29, 8
      %s31 = scalar_select %p30, 0, %s29
      %s32 = sadd.s32 1, %s23
      %s33 = scalar_select %p30, %s32, %s23
      %p34 = scmp.ge.s32.totalorder %s33, 2
      %s35 = scalar_select %p34, 0, %s33
      %s36 = ssub.s32 %s23, %s35
      %s37 = ssub.s32 %s24, %s31
      %s38 = sor.u32 %s36, %s37
      %p39 = scmp.eq.s32.totalorder %s38, 0
      %s41 = sadd.s32 %s40, 1
      %s42 = scalar_select %p39, %s40, %s41
      %p45 = pneg %p39
      %p46 = scmp.eq.s32.totalorder %s16, 15
      %p47 = por %p45, %p46
      %p48 = scmp.ne.s32.totalorder %s40, %s43
      %p49 = scmp.eq.s32.totalorder %s16, 0
      %p50 = por %p48, %p49
      %p51 = scmp.ne.s32.totalorder %s40, %s43
      %p52 = scmp.eq.s32.totalorder %s21, 15
      %p53 = por %p51, %p52
      %p54 = scmp.ne.s32.totalorder %s43, %s44
      %p55 = scmp.eq.s32.totalorder %s21, 0
      %p56 = por %p54, %p55
      %p57 = scmp.ne.s32.totalorder %s43, %s44
      %p58 = scmp.eq.s32.totalorder %s22, 15
      %p59 = por %p57, %p58
      %p61 = scmp.ne.s32.totalorder %s44, %s60
      %p62 = scmp.eq.s32.totalorder %s22, 0
      %p63 = por %p61, %p62
      %s64 = sadd.s32 %s24, 1
      %s65 = sadd.s32 %s31, 1
      %s66 = ssub.s32 %s23, %s35
      %s67 = ssub.s32 %s64, %s65
      %s68 = sor.u32 %s66, %s67
      %p69 = scmp.eq.s32.totalorder %s68, 0
      %s71 = sadd.s32 %s70, 1
      %s72 = scalar_select %p69, %s70, %s71
      %p75 = pneg %p69
      %p76 = scmp.eq.s32.totalorder %s16, 15
      %p77 = por %p75, %p76
      %p78 = scmp.ne.s32.totalorder %s70, %s73
      %p79 = scmp.eq.s32.totalorder %s16, 0
      %p80 = por %p78, %p79
      %p81 = scmp.ne.s32.totalorder %s70, %s73
      %p82 = scmp.eq.s32.totalorder %s21, 15
      %p83 = por %p81, %p82
      %p84 = scmp.ne.s32.totalorder %s73, %s74
      %p85 = scmp.eq.s32.totalorder %s21, 0
      %p86 = por %p84, %p85
      %p87 = scmp.ne.s32.totalorder %s73, %s74
      %p88 = scmp.eq.s32.totalorder %s22, 15
      %p89 = por %p87, %p88
      %p91 = scmp.ne.s32.totalorder %s74, %s90
      %p92 = scmp.eq.s32.totalorder %s22, 0
      %p93 = por %p91, %p92
      %s94 = sadd.s32 %s24, 2
      %s95 = sadd.s32 %s31, 2
      %s96 = ssub.s32 %s23, %s35
      %s97 = ssub.s32 %s94, %s95
      %s98 = sor.u32 %s96, %s97
      %p99 = scmp.eq.s32.totalorder %s98, 0
      %s101 = sadd.s32 %s100, 1
      %s102 = scalar_select %p99, %s100, %s101
      %p105 = pneg %p99
      %p106 = scmp.eq.s32.totalorder %s16, 15
      %p107 = por %p105, %p106
      %p108 = scmp.ne.s32.totalorder %s100, %s103
      %p109 = scmp.eq.s32.totalorder %s16, 0
      %p110 = por %p108, %p109
      %p111 = scmp.ne.s32.totalorder %s100, %s103
      %p112 = scmp.eq.s32.totalorder %s21, 15
      %p113 = por %p111, %p112
      %p114 = scmp.ne.s32.totalorder %s103, %s104
      %p115 = scmp.eq.s32.totalorder %s21, 0
      %p116 = por %p114, %p115
      %p117 = scmp.ne.s32.totalorder %s103, %s104
      %p118 = scmp.eq.s32.totalorder %s22, 15
      %p119 = por %p117, %p118
      %p121 = scmp.ne.s32.totalorder %s104, %s120
      %p122 = scmp.eq.s32.totalorder %s22, 0
      %p123 = por %p121, %p122
      %s125 = sadd.s32 %s124, 1
      %p128 = scmp.eq.s32.totalorder %s16, 15
      %p129 = scmp.ne.s32.totalorder %s124, %s126
      %p130 = scmp.eq.s32.totalorder %s16, 0
      %p131 = por %p129, %p130
      %p132 = scmp.ne.s32.totalorder %s124, %s126
      %p133 = scmp.eq.s32.totalorder %s21, 15
      %p134 = por %p132, %p133
      %p135 = scmp.ne.s32.totalorder %s126, %s127
      %p136 = scmp.eq.s32.totalorder %s21, 0
      %p137 = por %p135, %p136
      %p138 = scmp.ne.s32.totalorder %s126, %s127
      %p139 = scmp.eq.s32.totalorder %s22, 15
      %p140 = por %p138, %p139
      %p142 = scmp.ne.s32.totalorder %s127, %s141
      %p143 = scmp.eq.s32.totalorder %s22, 0
      %p144 = por %p142, %p143
      %s146 = sadd.s32 %s145, 1
      %p149 = scmp.eq.s32.totalorder %s16, 15
      %p150 = scmp.ne.s32.totalorder %s145, %s147
      %p151 = scmp.eq.s32.totalorder %s16, 0
      %p152 = por %p150, %p151
      %p153 = scmp.ne.s32.totalorder %s145, %s147
      %p154 = scmp.eq.s32.totalorder %s21, 15
      %p155 = por %p153, %p154
      %p156 = scmp.ne.s32.totalorder %s147, %s148
      %p157 = scmp.eq.s32.totalorder %s21, 0
      %p158 = por %p156, %p157
      %p159 = scmp.ne.s32.totalorder %s147, %s148
      %p160 = scmp.eq.s32.totalorder %s22, 15
      %p161 = por %p159, %p160
      %p163 = scmp.ne.s32.totalorder %s148, %s162
      %p164 = scmp.eq.s32.totalorder %s22, 0
      %p165 = por %p163, %p164
      %s166 = ssub.s32 %s23, %s35
      %s167 = ssub.s32 %s24, %s31
      %s168 = sor.u32 %s166, %s167
      %p169 = scmp.eq.s32.totalorder %s168, 0
      %s171 = sadd.s32 %s170, 1
      %s172 = scalar_select %p169, %s170, %s171
      %p175 = pneg %p169
      %p176 = scmp.eq.s32.totalorder %s16, 15
      %p177 = por %p175, %p176
      %p178 = scmp.ne.s32.totalorder %s170, %s173
      %p179 = scmp.eq.s32.totalorder %s16, 0
      %p180 = por %p178, %p179
      %p181 = scmp.ne.s32.totalorder %s170, %s173
      %p182 = scmp.eq.s32.totalorder %s21, 15
      %p183 = por %p181, %p182
      %p184 = scmp.ne.s32.totalorder %s173, %s174
      %p185 = scmp.eq.s32.totalorder %s21, 0
      %p186 = por %p184, %p185
      %p187 = scmp.ne.s32.totalorder %s173, %s174
      %p188 = scmp.eq.s32.totalorder %s22, 15
      %p189 = por %p187, %p188
      %p191 = scmp.ne.s32.totalorder %s174, %s190
      %p192 = scmp.eq.s32.totalorder %s22, 0
      %p193 = por %p191, %p192
      %s194 = ssub.s32 %s23, %s35
      %p195 = scmp.eq.s32.totalorder %s194, 0
      %s197 = sadd.s32 %s196, 1
      %s198 = scalar_select %p195, %s196, %s197
      %p201 = pneg %p195
      %p202 = scmp.eq.s32.totalorder %s16, 15
      %p203 = por %p201, %p202
      %p204 = scmp.ne.s32.totalorder %s196, %s199
      %p205 = scmp.eq.s32.totalorder %s16, 0
      %p206 = por %p204, %p205
      %p207 = scmp.ne.s32.totalorder %s196, %s199
      %p208 = scmp.eq.s32.totalorder %s21, 15
      %p209 = por %p207, %p208
      %p210 = scmp.ne.s32.totalorder %s199, %s200
      %p211 = scmp.eq.s32.totalorder %s21, 0
      %p212 = por %p210, %p211
      %p213 = scmp.ne.s32.totalorder %s199, %s200
      %p214 = scmp.eq.s32.totalorder %s22, 15
      %p215 = por %p213, %p214
      %p217 = scmp.ne.s32.totalorder %s200, %s216
      %p218 = scmp.eq.s32.totalorder %s22, 0
      %p219 = por %p217, %p218
      %p220 = scmp.le.s32.totalorder 1, %s16
      %p221 = scmp.lt.s32.totalorder %s16, 17
      %p222 = pnand %p220, %p221
      %p223 = pneg %p222
      // Predicated region
      $region9: #{tpu_custom_call.1} parent=5 // pred_check
        _
      $region10: #{tpu_custom_call.1} parent=5 // pred_check_branch
        %225 = sbr.rel (%p222) target = $region12
      $region11: #{tpu_custom_call.1} parent=5 // pred_region
        %s226 = ssub.s32 %s16, 1
        // Predicated region
        $region13: #{tpu_custom_call.1} parent=11 // pred_check
          %p227 = pneg %p137
        $region14: #{tpu_custom_call.1} parent=11 // pred_check_branch
          %229 = sbr.rel (%p227) target = $region16
        $region15: #{tpu_custom_call.1} parent=11 // pred_region
          _
        $region16: #{tpu_custom_call.1} parent=11 // pred_fallthru
          _
        // Predicated region
        $region17: #{tpu_custom_call.1} parent=11 // pred_check
          %p230 = pneg %p158
        $region18: #{tpu_custom_call.1} parent=11 // pred_check_branch
          %232 = sbr.rel (%p230) target = $region20
        $region19: #{tpu_custom_call.1} parent=11 // pred_region
          _
        $region20: #{tpu_custom_call.1} parent=11 // pred_fallthru
          _
      $region12: #{tpu_custom_call.1} parent=5 // pred_fallthru
        _
      %p233 = scmp.lt.s32.totalorder %s16, 16
      // Predicated region
      $region21: #{tpu_custom_call.1} parent=5 // pred_check
        %p234 = pneg %p233
      $region22: #{tpu_custom_call.1} parent=5 // pred_check_branch
        %236 = sbr.rel (%p234) target = $region24
      $region23: #{tpu_custom_call.1} parent=5 // pred_region
        // Predicated region
        $region25: #{tpu_custom_call.1} parent=23 // pred_check
          %p237 = pneg %p50
        $region26: #{tpu_custom_call.1} parent=23 // pred_check_branch
          %239 = sbr.rel (%p237) target = $region28
        $region27: #{tpu_custom_call.1} parent=23 // pred_region
          %p240 = scmp.lt.s32.totalorder %s23, 1
          %s241 = scalar_select %p240, %s23, 1
          %p242 = scmp.lt.s32.totalorder %s24, 9
          %s243 = scalar_select %p242, %s24, 9
          %s244 = smul.addr %s243, 20
          %s245 = smul.addr %s241, 200
          %s246 = sadd.s32 %s244, %s245
          %s247 = smul.addr %s246, 8
          %s248 = scalar_lea.vmem %s0, %s247
        $region28: #{tpu_custom_call.1} parent=23 // pred_fallthru
          _
        // Predicated region
        $region29: #{tpu_custom_call.1} parent=23 // pred_check
          %p249 = pneg %p80
        $region30: #{tpu_custom_call.1} parent=23 // pred_check_branch
          %251 = sbr.rel (%p249) target = $region32
        $region31: #{tpu_custom_call.1} parent=23 // pred_region
          %s252 = sadd.s32 %s24, 1
          %p253 = scmp.lt.s32.totalorder %s23, 1
          %s254 = scalar_select %p253, %s23, 1
          %p255 = scmp.lt.s32.totalorder %s252, 9
          %s256 = scalar_select %p255, %s252, 9
          %s257 = smul.addr %s256, 20
          %s258 = smul.addr %s254, 200
          %s259 = sadd.s32 %s257, %s258
          %s260 = smul.addr %s259, 8
          %s261 = scalar_lea.vmem %s1, %s260
          %s262 = sadd.s32 %s24, 1
        $region32: #{tpu_custom_call.1} parent=23 // pred_fallthru
          _
        // Predicated region
        $region33: #{tpu_custom_call.1} parent=23 // pred_check
          %p263 = pneg %p110
        $region34: #{tpu_custom_call.1} parent=23 // pred_check_branch
          %265 = sbr.rel (%p263) target = $region36
        $region35: #{tpu_custom_call.1} parent=23 // pred_region
          %s266 = sadd.s32 %s24, 2
          %p267 = scmp.lt.s32.totalorder %s23, 1
          %s268 = scalar_select %p267, %s23, 1
          %p269 = scmp.lt.s32.totalorder %s266, 9
          %s270 = scalar_select %p269, %s266, 9
          %s271 = smul.addr %s270, 20
          %s272 = smul.addr %s268, 200
          %s273 = sadd.s32 %s271, %s272
          %s274 = smul.addr %s273, 8
          %s275 = scalar_lea.vmem %s2, %s274
          %s276 = sadd.s32 %s24, 2
        $region36: #{tpu_custom_call.1} parent=23 // pred_fallthru
          _
      $region24: #{tpu_custom_call.1} parent=5 // pred_fallthru
        _
      %p277 = scmp.le.s32.totalorder 1, %s16
      %p278 = scmp.lt.s32.totalorder %s16, 17
      %p279 = pnand %p277, %p278
      %p280 = pneg %p279
      // Predicated region
      $region37: #{tpu_custom_call.1} parent=5 // pred_check
        _
      $region38: #{tpu_custom_call.1} parent=5 // pred_check_branch
        %282 = sbr.rel (%p279) target = $region40
      $region39: #{tpu_custom_call.1} parent=5 // pred_region
        %s283 = ssub.s32 %s16, 1
        %p284 = scmp.lt.s32.totalorder %s25, 1
        %s285 = scalar_select %p284, %s25, 1
        %p286 = scmp.lt.s32.totalorder %s26, 9
        %s287 = scalar_select %p286, %s26, 9
        %s288 = smul.addr %s287, 20
        %s289 = smul.addr %s285, 200
        %s290 = sadd.s32 %s288, %s289
        %s291 = smul.addr %s290, 8
        %s292 = scalar_lea.vmem %s0, %s291
        %p293 = pneg %p56
        %p294 = pneg %p53
        %s295 = sadd.s32 %s26, 1
        %p296 = scmp.lt.s32.totalorder %s25, 1
        %s297 = scalar_select %p296, %s25, 1
        %p298 = scmp.lt.s32.totalorder %s295, 9
        %s299 = scalar_select %p298, %s295, 9
        %s300 = smul.addr %s299, 20
        %s301 = smul.addr %s297, 200
        %s302 = sadd.s32 %s300, %s301
        %s303 = smul.addr %s302, 8
        %s304 = scalar_lea.vmem %s1, %s303
        %p305 = pneg %p86
        %p306 = pneg %p83
        %s307 = sadd.s32 %s26, 2
        %p308 = scmp.lt.s32.totalorder %s25, 1
        %s309 = scalar_select %p308, %s25, 1
        %p310 = scmp.lt.s32.totalorder %s307, 9
        %s311 = scalar_select %p310, %s307, 9
        %s312 = smul.addr %s311, 20
        %s313 = smul.addr %s309, 200
        %s314 = sadd.s32 %s312, %s313
        %s315 = smul.addr %s314, 8
        %s316 = scalar_lea.vmem %s2, %s315
        %p317 = pneg %p116
        %p318 = pneg %p113
        %p319 = pneg %p137
        %p320 = pneg %p134
        %p321 = pneg %p158
        %p322 = pneg %p155
        %p323 = pneg %p186
        %p324 = pneg %p183
        %p325 = scmp.lt.s32.totalorder %s25, 1
        %s326 = scalar_select %p325, %s25, 1
        %p327 = scmp.lt.s32.totalorder %s26, 7
        %s328 = scalar_select %p327, %s26, 7
        %s329 = smul.addr %s328, 8
        %s330 = smul.addr %s326, 64
        %s331 = sadd.s32 %s329, %s330
        %s332 = smul.addr %s331, 8
        %s333 = scalar_lea.vmem %s5, %s332
        %p334 = pneg %p212
        %p335 = pneg %p209
        %s336 = sand.u32 %s199, 1
        %s337 = scalar_lea.sflag [#allocation3], %s336
        %s338 = sand.u32 %s199, 1
        %s339 = smul.addr %s338, 2
        %s340 = scalar_lea.vmem [#allocation2], %s339
        %p341 = scmp.lt.s32.totalorder %s25, 1
        %s342 = scalar_select %p341, %s25, 1
        %p343 = scmp.lt.s32.totalorder %s26, 9
        %s344 = scalar_select %p343, %s26, 9
        %s345 = smul.addr %s344, 20
        %s346 = smul.addr %s342, 200
        %s347 = sadd.s32 %s345, %s346
        %s348 = smul.addr %s347, 8
        %s349 = scalar_lea.vmem %s0, %s348
        %s350 = sadd.s32 %s26, 1
        %p351 = scmp.lt.s32.totalorder %s25, 1
        %s352 = scalar_select %p351, %s25, 1
        %p353 = scmp.lt.s32.totalorder %s350, 9
        %s354 = scalar_select %p353, %s350, 9
        %s355 = smul.addr %s354, 20
        %s356 = smul.addr %s352, 200
        %s357 = sadd.s32 %s355, %s356
        %s358 = smul.addr %s357, 8
        %s359 = scalar_lea.vmem %s1, %s358
        %s360 = sadd.s32 %s26, 1
        %s361 = sadd.s32 %s26, 2
        %p362 = scmp.lt.s32.totalorder %s25, 1
        %s363 = scalar_select %p362, %s25, 1
        %p364 = scmp.lt.s32.totalorder %s361, 9
        %s365 = scalar_select %p364, %s361, 9
        %s366 = smul.addr %s365, 20
        %s367 = smul.addr %s363, 200
        %s368 = sadd.s32 %s366, %s367
        %s369 = smul.addr %s368, 8
        %s370 = scalar_lea.vmem %s2, %s369
        %s371 = sadd.s32 %s26, 2
        %p372 = scmp.lt.s32.totalorder %s25, 1
        %s373 = scalar_select %p372, %s25, 1
        %p374 = scmp.lt.s32.totalorder %s26, 7
        %s375 = scalar_select %p374, %s26, 7
        %s376 = smul.addr %s375, 8
        %s377 = smul.addr %s373, 64
        %s378 = sadd.s32 %s376, %s377
        %s379 = smul.addr %s378, 8
        %s380 = scalar_lea.vmem %s5, %s379
        %v381 = vld [vmem:[%s349] sm:$0xff]
        %v382 = vld [vmem:[%s349 + $0x8] sm:$0x3]
        %v383 = vld [vmem:[%s349 + $0x10] sm:$0xff]
        %v384 = vld [vmem:[%s349 + $0x18] sm:$0x3]
        %v385 = vld [vmem:[%s349 + $0x20] sm:$0xff]
        %v386 = vld [vmem:[%s349 + $0x28] sm:$0x3]
        %v387 = vld [vmem:[%s349 + $0x30] sm:$0xff]
        %v388 = vld [vmem:[%s349 + $0x38] sm:$0x3]
        %v389 = vld [vmem:[%s349 + $0x40] sm:$0xff]
        %v390 = vld [vmem:[%s349 + $0x48] sm:$0x3]
        %v391 = vld [vmem:[%s349 + $0x50] sm:$0xff]
        %v392 = vld [vmem:[%s349 + $0x58] sm:$0x3]
        %v393 = vld [vmem:[%s349 + $0x60] sm:$0xff]
        %v394 = vld [vmem:[%s349 + $0x68] sm:$0x3]
        %v395 = vld [vmem:[%s349 + $0x70] sm:$0xff]
        %v396 = vld [vmem:[%s349 + $0x78] sm:$0x3]
        %v397 = vld [vmem:[%s349 + $0x80] sm:$0xff]
        %v398 = vld [vmem:[%s349 + $0x88] sm:$0x3]
        %v399 = vld [vmem:[%s349 + $0x90] sm:$0xff]
        %v400 = vld [vmem:[%s349 + $0x98] sm:$0x3]
        %v401 = vld [vmem:[%s3] sm:$0x1]
        %v402 = vlaneseq
        %v403 = vshrl.u32 %v402, 7
        %v404 = vsub.s32 0, %v403
        %v405 = vrot.slane %v401, %v404
        %v406 = vmul.f32 %v381, %v405
        %v407 = vmul.f32 %v383, %v405
        %v408 = vmul.f32 %v385, %v405
        %v409 = vmul.f32 %v387, %v405
        %v410 = vmul.f32 %v389, %v405
        %v411 = vmul.f32 %v391, %v405
        %v412 = vmul.f32 %v393, %v405
        %v413 = vmul.f32 %v395, %v405
        %v414 = vadd.f32 %v406, 0.0
        %v415 = vadd.f32 %v407, 0.0
        %v416 = vadd.f32 %v408, 0.0
        %v417 = vadd.f32 %v409, 0.0
        %v418 = vadd.f32 %v410, 0.0
        %v419 = vadd.f32 %v411, 0.0
        %v420 = vadd.f32 %v412, 0.0
        %v421 = vadd.f32 %v413, 0.0
        %v422 = vld [vmem:[%s3 + $0x3] sm:$0x1]
        %v423 = vlaneseq
        %v424 = vshrl.u32 %v423, 7
        %v425 = vsub.s32 0, %v424
        %v426 = vrot.slane %v422, %v425
        %v427 = vmul.f32 %v383, %v426
        %v428 = vmul.f32 %v385, %v426
        %v429 = vmul.f32 %v387, %v426
        %v430 = vmul.f32 %v389, %v426
        %v431 = vmul.f32 %v391, %v426
        %v432 = vmul.f32 %v393, %v426
        %v433 = vmul.f32 %v395, %v426
        %v434 = vmul.f32 %v397, %v426
        %v435 = vadd.f32 %v414, %v427
        %v436 = vadd.f32 %v415, %v428
        %v437 = vadd.f32 %v416, %v429
        %v438 = vadd.f32 %v417, %v430
        %v439 = vadd.f32 %v418, %v431
        %v440 = vadd.f32 %v419, %v432
        %v441 = vadd.f32 %v420, %v433
        %v442 = vadd.f32 %v421, %v434
        %v443 = vld [vmem:[%s3 + $0x6] sm:$0x1]
        %v444 = vlaneseq
        %v445 = vshrl.u32 %v444, 7
        %v446 = vsub.s32 0, %v445
        %v447 = vrot.slane %v443, %v446
        %v448 = vmul.f32 %v385, %v447
        %v449 = vmul.f32 %v387, %v447
        %v450 = vmul.f32 %v389, %v447
        %v451 = vmul.f32 %v391, %v447
        %v452 = vmul.f32 %v393, %v447
        %v453 = vmul.f32 %v395, %v447
        %v454 = vmul.f32 %v397, %v447
        %v455 = vmul.f32 %v399, %v447
        %v456 = vadd.f32 %v435, %v448
        %v457 = vadd.f32 %v436, %v449
        %v458 = vadd.f32 %v437, %v450
        %v459 = vadd.f32 %v438, %v451
        %v460 = vadd.f32 %v439, %v452
        %v461 = vadd.f32 %v440, %v453
        %v462 = vadd.f32 %v441, %v454
        %v463 = vadd.f32 %v442, %v455
        %v464 = vld [vmem:[%s3 + $0x1] sm:$0x1]
        %v465 = vlaneseq
        %v466 = vshrl.u32 %v465, 7
        %v467 = vsub.s32 0, %v466
        %v468 = vrot.slane %v464, %v467
        %v469 = vmul.f32 %v381, %v468
        %v470 = vmul.f32 %v382, %v468
        %v471 = vmul.f32 %v383, %v468
        %v472 = vmul.f32 %v384, %v468
        %v473 = vmul.f32 %v385, %v468
        %v474 = vmul.f32 %v386, %v468
        %v475 = vmul.f32 %v387, %v468
        %v476 = vmul.f32 %v388, %v468
        %v477 = vmul.f32 %v389, %v468
        %v478 = vmul.f32 %v390, %v468
        %v479 = vmul.f32 %v391, %v468
        %v480 = vmul.f32 %v392, %v468
        %v481 = vmul.f32 %v393, %v468
        %v482 = vmul.f32 %v394, %v468
        %v483 = vmul.f32 %v395, %v468
        %v484 = vmul.f32 %v396, %v468
        %vm501 = vcmask 1046528
        %v502 = vrot.slane %v469, 1
        %v503 = vrot.slane %v470, 1
        %v504 = vsel %vm501, %v502, %v503
        %v505 = vrot.slane %v471, 1
        %v506 = vrot.slane %v472, 1
        %v507 = vsel %vm501, %v505, %v506
        %v508 = vrot.slane %v473, 1
        %v509 = vrot.slane %v474, 1
        %v510 = vsel %vm501, %v508, %v509
        %v511 = vrot.slane %v475, 1
        %v512 = vrot.slane %v476, 1
        %v513 = vsel %vm501, %v511, %v512
        %v514 = vrot.slane %v477, 1
        %v515 = vrot.slane %v478, 1
        %v516 = vsel %vm501, %v514, %v515
        %v517 = vrot.slane %v479, 1
        %v518 = vrot.slane %v480, 1
        %v519 = vsel %vm501, %v517, %v518
        %v520 = vrot.slane %v481, 1
        %v521 = vrot.slane %v482, 1
        %v522 = vsel %vm501, %v520, %v521
        %v523 = vrot.slane %v483, 1
        %v524 = vrot.slane %v484, 1
        %v525 = vsel %vm501, %v523, %v524
        %v534 = vadd.f32 %v456, %v504
        %v535 = vadd.f32 %v457, %v507
        %v536 = vadd.f32 %v458, %v510
        %v537 = vadd.f32 %v459, %v513
        %v538 = vadd.f32 %v460, %v516
        %v539 = vadd.f32 %v461, %v519
        %v540 = vadd.f32 %v462, %v522
        %v541 = vadd.f32 %v463, %v525
        %v542 = vld [vmem:[%s3 + $0x4] sm:$0x1]
        %v543 = vlaneseq
        %v544 = vshrl.u32 %v543, 7
        %v545 = vsub.s32 0, %v544
        %v546 = vrot.slane %v542, %v545
        %v547 = vmul.f32 %v383, %v546
        %v548 = vmul.f32 %v384, %v546
        %v549 = vmul.f32 %v385, %v546
        %v550 = vmul.f32 %v386, %v546
        %v551 = vmul.f32 %v387, %v546
        %v552 = vmul.f32 %v388, %v546
        %v553 = vmul.f32 %v389, %v546
        %v554 = vmul.f32 %v390, %v546
        %v555 = vmul.f32 %v391, %v546
        %v556 = vmul.f32 %v392, %v546
        %v557 = vmul.f32 %v393, %v546
        %v558 = vmul.f32 %v394, %v546
        %v559 = vmul.f32 %v395, %v546
        %v560 = vmul.f32 %v396, %v546
        %v561 = vmul.f32 %v397, %v546
        %v562 = vmul.f32 %v398, %v546
        %v579 = vrot.slane %v547, 1
        %v580 = vrot.slane %v548, 1
        %v581 = vsel %vm501, %v579, %v580
        %v582 = vrot.slane %v549, 1
        %v583 = vrot.slane %v550, 1
        %v584 = vsel %vm501, %v582, %v583
        %v585 = vrot.slane %v551, 1
        %v586 = vrot.slane %v552, 1
        %v587 = vsel %vm501, %v585, %v586
        %v588 = vrot.slane %v553, 1
        %v589 = vrot.slane %v554, 1
        %v590 = vsel %vm501, %v588, %v589
        %v591 = vrot.slane %v555, 1
        %v592 = vrot.slane %v556, 1
        %v593 = vsel %vm501, %v591, %v592
        %v594 = vrot.slane %v557, 1
        %v595 = vrot.slane %v558, 1
        %v596 = vsel %vm501, %v594, %v595
        %v597 = vrot.slane %v559, 1
        %v598 = vrot.slane %v560, 1
        %v599 = vsel %vm501, %v597, %v598
        %v600 = vrot.slane %v561, 1
        %v601 = vrot.slane %v562, 1
        %v602 = vsel %vm501, %v600, %v601
        %v611 = vadd.f32 %v534, %v581
        %v612 = vadd.f32 %v535, %v584
        %v613 = vadd.f32 %v536, %v587
        %v614 = vadd.f32 %v537, %v590
        %v615 = vadd.f32 %v538, %v593
        %v616 = vadd.f32 %v539, %v596
        %v617 = vadd.f32 %v540, %v599
        %v618 = vadd.f32 %v541, %v602
        %v619 = vld [vmem:[%s3 + $0x7] sm:$0x1]
        %v620 = vlaneseq
        %v621 = vshrl.u32 %v620, 7
        %v622 = vsub.s32 0, %v621
        %v623 = vrot.slane %v619, %v622
        %v624 = vmul.f32 %v385, %v623
        %v625 = vmul.f32 %v386, %v623
        %v626 = vmul.f32 %v387, %v623
        %v627 = vmul.f32 %v388, %v623
        %v628 = vmul.f32 %v389, %v623
        %v629 = vmul.f32 %v390, %v623
        %v630 = vmul.f32 %v391, %v623
        %v631 = vmul.f32 %v392, %v623
        %v632 = vmul.f32 %v393, %v623
        %v633 = vmul.f32 %v394, %v623
        %v634 = vmul.f32 %v395, %v623
        %v635 = vmul.f32 %v396, %v623
        %v636 = vmul.f32 %v397, %v623
        %v637 = vmul.f32 %v398, %v623
        %v638 = vmul.f32 %v399, %v623
        %v639 = vmul.f32 %v400, %v623
        %v656 = vrot.slane %v624, 1
        %v657 = vrot.slane %v625, 1
        %v658 = vsel %vm501, %v656, %v657
        %v659 = vrot.slane %v626, 1
        %v660 = vrot.slane %v627, 1
        %v661 = vsel %vm501, %v659, %v660
        %v662 = vrot.slane %v628, 1
        %v663 = vrot.slane %v629, 1
        %v664 = vsel %vm501, %v662, %v663
        %v665 = vrot.slane %v630, 1
        %v666 = vrot.slane %v631, 1
        %v667 = vsel %vm501, %v665, %v666
        %v668 = vrot.slane %v632, 1
        %v669 = vrot.slane %v633, 1
        %v670 = vsel %vm501, %v668, %v669
        %v671 = vrot.slane %v634, 1
        %v672 = vrot.slane %v635, 1
        %v673 = vsel %vm501, %v671, %v672
        %v674 = vrot.slane %v636, 1
        %v675 = vrot.slane %v637, 1
        %v676 = vsel %vm501, %v674, %v675
        %v677 = vrot.slane %v638, 1
        %v678 = vrot.slane %v639, 1
        %v679 = vsel %vm501, %v677, %v678
        %v688 = vadd.f32 %v611, %v658
        %v689 = vadd.f32 %v612, %v661
        %v690 = vadd.f32 %v613, %v664
        %v691 = vadd.f32 %v614, %v667
        %v692 = vadd.f32 %v615, %v670
        %v693 = vadd.f32 %v616, %v673
        %v694 = vadd.f32 %v617, %v676
        %v695 = vadd.f32 %v618, %v679
        %v696 = vld [vmem:[%s3 + $0x2] sm:$0x1]
        %v697 = vlaneseq
        %v698 = vshrl.u32 %v697, 7
        %v699 = vsub.s32 0, %v698
        %v700 = vrot.slane %v696, %v699
        %v701 = vmul.f32 %v381, %v700
        %v702 = vmul.f32 %v382, %v700
        %v703 = vmul.f32 %v383, %v700
        %v704 = vmul.f32 %v384, %v700
        %v705 = vmul.f32 %v385, %v700
        %v706 = vmul.f32 %v386, %v700
        %v707 = vmul.f32 %v387, %v700
        %v708 = vmul.f32 %v388, %v700
        %v709 = vmul.f32 %v389, %v700
        %v710 = vmul.f32 %v390, %v700
        %v711 = vmul.f32 %v391, %v700
        %v712 = vmul.f32 %v392, %v700
        %v713 = vmul.f32 %v393, %v700
        %v714 = vmul.f32 %v394, %v700
        %v715 = vmul.f32 %v395, %v700
        %v716 = vmul.f32 %v396, %v700
        %vm733 = vcmask 1045504
        %v734 = vrot.slane %v701, 2
        %v735 = vrot.slane %v702, 2
        %v736 = vsel %vm733, %v734, %v735
        %v737 = vrot.slane %v703, 2
        %v738 = vrot.slane %v704, 2
        %v739 = vsel %vm733, %v737, %v738
        %v740 = vrot.slane %v705, 2
        %v741 = vrot.slane %v706, 2
        %v742 = vsel %vm733, %v740, %v741
        %v743 = vrot.slane %v707, 2
        %v744 = vrot.slane %v708, 2
        %v745 = vsel %vm733, %v743, %v744
        %v746 = vrot.slane %v709, 2
        %v747 = vrot.slane %v710, 2
        %v748 = vsel %vm733, %v746, %v747
        %v749 = vrot.slane %v711, 2
        %v750 = vrot.slane %v712, 2
        %v751 = vsel %vm733, %v749, %v750
        %v752 = vrot.slane %v713, 2
        %v753 = vrot.slane %v714, 2
        %v754 = vsel %vm733, %v752, %v753
        %v755 = vrot.slane %v715, 2
        %v756 = vrot.slane %v716, 2
        %v757 = vsel %vm733, %v755, %v756
        %v766 = vadd.f32 %v688, %v736
        %v767 = vadd.f32 %v689, %v739
        %v768 = vadd.f32 %v690, %v742
        %v769 = vadd.f32 %v691, %v745
        %v770 = vadd.f32 %v692, %v748
        %v771 = vadd.f32 %v693, %v751
        %v772 = vadd.f32 %v694, %v754
        %v773 = vadd.f32 %v695, %v757
        %v774 = vld [vmem:[%s3 + $0x5] sm:$0x1]
        %v775 = vlaneseq
        %v776 = vshrl.u32 %v775, 7
        %v777 = vsub.s32 0, %v776
        %v778 = vrot.slane %v774, %v777
        %v779 = vmul.f32 %v383, %v778
        %v780 = vmul.f32 %v384, %v778
        %v781 = vmul.f32 %v385, %v778
        %v782 = vmul.f32 %v386, %v778
        %v783 = vmul.f32 %v387, %v778
        %v784 = vmul.f32 %v388, %v778
        %v785 = vmul.f32 %v389, %v778
        %v786 = vmul.f32 %v390, %v778
        %v787 = vmul.f32 %v391, %v778
        %v788 = vmul.f32 %v392, %v778
        %v789 = vmul.f32 %v393, %v778
        %v790 = vmul.f32 %v394, %v778
        %v791 = vmul.f32 %v395, %v778
        %v792 = vmul.f32 %v396, %v778
        %v793 = vmul.f32 %v397, %v778
        %v794 = vmul.f32 %v398, %v778
        %v811 = vrot.slane %v779, 2
        %v812 = vrot.slane %v780, 2
        %v813 = vsel %vm733, %v811, %v812
        %v814 = vrot.slane %v781, 2
        %v815 = vrot.slane %v782, 2
        %v816 = vsel %vm733, %v814, %v815
        %v817 = vrot.slane %v783, 2
        %v818 = vrot.slane %v784, 2
        %v819 = vsel %vm733, %v817, %v818
        %v820 = vrot.slane %v785, 2
        %v821 = vrot.slane %v786, 2
        %v822 = vsel %vm733, %v820, %v821
        %v823 = vrot.slane %v787, 2
        %v824 = vrot.slane %v788, 2
        %v825 = vsel %vm733, %v823, %v824
        %v826 = vrot.slane %v789, 2
        %v827 = vrot.slane %v790, 2
        %v828 = vsel %vm733, %v826, %v827
        %v829 = vrot.slane %v791, 2
        %v830 = vrot.slane %v792, 2
        %v831 = vsel %vm733, %v829, %v830
        %v832 = vrot.slane %v793, 2
        %v833 = vrot.slane %v794, 2
        %v834 = vsel %vm733, %v832, %v833
        %v843 = vadd.f32 %v766, %v813
        %v844 = vadd.f32 %v767, %v816
        %v845 = vadd.f32 %v768, %v819
        %v846 = vadd.f32 %v769, %v822
        %v847 = vadd.f32 %v770, %v825
        %v848 = vadd.f32 %v771, %v828
        %v849 = vadd.f32 %v772, %v831
        %v850 = vadd.f32 %v773, %v834
        %v851 = vld [vmem:[%s3 + $0x8] sm:$0x1]
        %v852 = vlaneseq
        %v853 = vshrl.u32 %v852, 7
        %v854 = vsub.s32 0, %v853
        %v855 = vrot.slane %v851, %v854
        %v856 = vmul.f32 %v385, %v855
        %v857 = vmul.f32 %v386, %v855
        %v858 = vmul.f32 %v387, %v855
        %v859 = vmul.f32 %v388, %v855
        %v860 = vmul.f32 %v389, %v855
        %v861 = vmul.f32 %v390, %v855
        %v862 = vmul.f32 %v391, %v855
        %v863 = vmul.f32 %v392, %v855
        %v864 = vmul.f32 %v393, %v855
        %v865 = vmul.f32 %v394, %v855
        %v866 = vmul.f32 %v395, %v855
        %v867 = vmul.f32 %v396, %v855
        %v868 = vmul.f32 %v397, %v855
        %v869 = vmul.f32 %v398, %v855
        %v870 = vmul.f32 %v399, %v855
        %v871 = vmul.f32 %v400, %v855
        %v888 = vrot.slane %v856, 2
        %v889 = vrot.slane %v857, 2
        %v890 = vsel %vm733, %v888, %v889
        %v891 = vrot.slane %v858, 2
        %v892 = vrot.slane %v859, 2
        %v893 = vsel %vm733, %v891, %v892
        %v894 = vrot.slane %v860, 2
        %v895 = vrot.slane %v861, 2
        %v896 = vsel %vm733, %v894, %v895
        %v897 = vrot.slane %v862, 2
        %v898 = vrot.slane %v863, 2
        %v899 = vsel %vm733, %v897, %v898
        %v900 = vrot.slane %v864, 2
        %v901 = vrot.slane %v865, 2
        %v902 = vsel %vm733, %v900, %v901
        %v903 = vrot.slane %v866, 2
        %v904 = vrot.slane %v867, 2
        %v905 = vsel %vm733, %v903, %v904
        %v906 = vrot.slane %v868, 2
        %v907 = vrot.slane %v869, 2
        %v908 = vsel %vm733, %v906, %v907
        %v909 = vrot.slane %v870, 2
        %v910 = vrot.slane %v871, 2
        %v911 = vsel %vm733, %v909, %v910
        %v920 = vadd.f32 %v843, %v890
        %v921 = vadd.f32 %v844, %v893
        %v922 = vadd.f32 %v845, %v896
        %v923 = vadd.f32 %v846, %v899
        %v924 = vadd.f32 %v847, %v902
        %v925 = vadd.f32 %v848, %v905
        %v926 = vadd.f32 %v849, %v908
        %v927 = vadd.f32 %v850, %v911
        %v928 = vld [vmem:[%s359] sm:$0xff]
        %v929 = vld [vmem:[%s359 + $0x8] sm:$0x3]
        %v930 = vld [vmem:[%s359 + $0x10] sm:$0xff]
        %v931 = vld [vmem:[%s359 + $0x18] sm:$0x3]
        %v932 = vld [vmem:[%s359 + $0x20] sm:$0xff]
        %v933 = vld [vmem:[%s359 + $0x28] sm:$0x3]
        %v934 = vld [vmem:[%s359 + $0x30] sm:$0xff]
        %v935 = vld [vmem:[%s359 + $0x38] sm:$0x3]
        %v936 = vld [vmem:[%s359 + $0x40] sm:$0xff]
        %v937 = vld [vmem:[%s359 + $0x48] sm:$0x3]
        %v938 = vld [vmem:[%s359 + $0x50] sm:$0xff]
        %v939 = vld [vmem:[%s359 + $0x58] sm:$0x3]
        %v940 = vld [vmem:[%s359 + $0x60] sm:$0xff]
        %v941 = vld [vmem:[%s359 + $0x68] sm:$0x3]
        %v942 = vld [vmem:[%s359 + $0x70] sm:$0xff]
        %v943 = vld [vmem:[%s359 + $0x78] sm:$0x3]
        %v944 = vld [vmem:[%s359 + $0x80] sm:$0xff]
        %v945 = vld [vmem:[%s359 + $0x88] sm:$0x3]
        %v946 = vld [vmem:[%s359 + $0x90] sm:$0xff]
        %v947 = vld [vmem:[%s359 + $0x98] sm:$0x3]
        %v948 = vld [vmem:[%s3 + $0x9] sm:$0x1]
        %v949 = vlaneseq
        %v950 = vshrl.u32 %v949, 7
        %v951 = vsub.s32 0, %v950
        %v952 = vrot.slane %v948, %v951
        %v953 = vmul.f32 %v928, %v952
        %v954 = vmul.f32 %v930, %v952
        %v955 = vmul.f32 %v932, %v952
        %v956 = vmul.f32 %v934, %v952
        %v957 = vmul.f32 %v936, %v952
        %v958 = vmul.f32 %v938, %v952
        %v959 = vmul.f32 %v940, %v952
        %v960 = vmul.f32 %v942, %v952
        %v961 = vadd.f32 %v920, %v953
        %v962 = vadd.f32 %v921, %v954
        %v963 = vadd.f32 %v922, %v955
        %v964 = vadd.f32 %v923, %v956
        %v965 = vadd.f32 %v924, %v957
        %v966 = vadd.f32 %v925, %v958
        %v967 = vadd.f32 %v926, %v959
        %v968 = vadd.f32 %v927, %v960
        %v969 = vld [vmem:[%s3 + $0xc] sm:$0x1]
        %v970 = vlaneseq
        %v971 = vshrl.u32 %v970, 7
        %v972 = vsub.s32 0, %v971
        %v973 = vrot.slane %v969, %v972
        %v974 = vmul.f32 %v930, %v973
        %v975 = vmul.f32 %v932, %v973
        %v976 = vmul.f32 %v934, %v973
        %v977 = vmul.f32 %v936, %v973
        %v978 = vmul.f32 %v938, %v973
        %v979 = vmul.f32 %v940, %v973
        %v980 = vmul.f32 %v942, %v973
        %v981 = vmul.f32 %v944, %v973
        %v982 = vadd.f32 %v961, %v974
        %v983 = vadd.f32 %v962, %v975
        %v984 = vadd.f32 %v963, %v976
        %v985 = vadd.f32 %v964, %v977
        %v986 = vadd.f32 %v965, %v978
        %v987 = vadd.f32 %v966, %v979
        %v988 = vadd.f32 %v967, %v980
        %v989 = vadd.f32 %v968, %v981
        %v990 = vld [vmem:[%s3 + $0xf] sm:$0x1]
        %v991 = vlaneseq
        %v992 = vshrl.u32 %v991, 7
        %v993 = vsub.s32 0, %v992
        %v994 = vrot.slane %v990, %v993
        %v995 = vmul.f32 %v932, %v994
        %v996 = vmul.f32 %v934, %v994
        %v997 = vmul.f32 %v936, %v994
        %v998 = vmul.f32 %v938, %v994
        %v999 = vmul.f32 %v940, %v994
        %v1000 = vmul.f32 %v942, %v994
        %v1001 = vmul.f32 %v944, %v994
        %v1002 = vmul.f32 %v946, %v994
        %v1003 = vadd.f32 %v982, %v995
        %v1004 = vadd.f32 %v983, %v996
        %v1005 = vadd.f32 %v984, %v997
        %v1006 = vadd.f32 %v985, %v998
        %v1007 = vadd.f32 %v986, %v999
        %v1008 = vadd.f32 %v987, %v1000
        %v1009 = vadd.f32 %v988, %v1001
        %v1010 = vadd.f32 %v989, %v1002
        %v1011 = vld [vmem:[%s3 + $0xa] sm:$0x1]
        %v1012 = vlaneseq
        %v1013 = vshrl.u32 %v1012, 7
        %v1014 = vsub.s32 0, %v1013
        %v1015 = vrot.slane %v1011, %v1014
        %v1016 = vmul.f32 %v928, %v1015
        %v1017 = vmul.f32 %v929, %v1015
        %v1018 = vmul.f32 %v930, %v1015
        %v1019 = vmul.f32 %v931, %v1015
        %v1020 = vmul.f32 %v932, %v1015
        %v1021 = vmul.f32 %v933, %v1015
        %v1022 = vmul.f32 %v934, %v1015
        %v1023 = vmul.f32 %v935, %v1015
        %v1024 = vmul.f32 %v936, %v1015
        %v1025 = vmul.f32 %v937, %v1015
        %v1026 = vmul.f32 %v938, %v1015
        %v1027 = vmul.f32 %v939, %v1015
        %v1028 = vmul.f32 %v940, %v1015
        %v1029 = vmul.f32 %v941, %v1015
        %v1030 = vmul.f32 %v942, %v1015
        %v1031 = vmul.f32 %v943, %v1015
        %v1048 = vrot.slane %v1016, 1
        %v1049 = vrot.slane %v1017, 1
        %v1050 = vsel %vm501, %v1048, %v1049
        %v1051 = vrot.slane %v1018, 1
        %v1052 = vrot.slane %v1019, 1
        %v1053 = vsel %vm501, %v1051, %v1052
        %v1054 = vrot.slane %v1020, 1
        %v1055 = vrot.slane %v1021, 1
        %v1056 = vsel %vm501, %v1054, %v1055
        %v1057 = vrot.slane %v1022, 1
        %v1058 = vrot.slane %v1023, 1
        %v1059 = vsel %vm501, %v1057, %v1058
        %v1060 = vrot.slane %v1024, 1
        %v1061 = vrot.slane %v1025, 1
        %v1062 = vsel %vm501, %v1060, %v1061
        %v1063 = vrot.slane %v1026, 1
        %v1064 = vrot.slane %v1027, 1
        %v1065 = vsel %vm501, %v1063, %v1064
        %v1066 = vrot.slane %v1028, 1
        %v1067 = vrot.slane %v1029, 1
        %v1068 = vsel %vm501, %v1066, %v1067
        %v1069 = vrot.slane %v1030, 1
        %v1070 = vrot.slane %v1031, 1
        %v1071 = vsel %vm501, %v1069, %v1070
        %v1080 = vadd.f32 %v1003, %v1050
        %v1081 = vadd.f32 %v1004, %v1053
        %v1082 = vadd.f32 %v1005, %v1056
        %v1083 = vadd.f32 %v1006, %v1059
        %v1084 = vadd.f32 %v1007, %v1062
        %v1085 = vadd.f32 %v1008, %v1065
        %v1086 = vadd.f32 %v1009, %v1068
        %v1087 = vadd.f32 %v1010, %v1071
        %v1088 = vld [vmem:[%s3 + $0xd] sm:$0x1]
        %v1089 = vlaneseq
        %v1090 = vshrl.u32 %v1089, 7
        %v1091 = vsub.s32 0, %v1090
        %v1092 = vrot.slane %v1088, %v1091
        %v1093 = vmul.f32 %v930, %v1092
        %v1094 = vmul.f32 %v931, %v1092
        %v1095 = vmul.f32 %v932, %v1092
        %v1096 = vmul.f32 %v933, %v1092
        %v1097 = vmul.f32 %v934, %v1092
        %v1098 = vmul.f32 %v935, %v1092
        %v1099 = vmul.f32 %v936, %v1092
        %v1100 = vmul.f32 %v937, %v1092
        %v1101 = vmul.f32 %v938, %v1092
        %v1102 = vmul.f32 %v939, %v1092
        %v1103 = vmul.f32 %v940, %v1092
        %v1104 = vmul.f32 %v941, %v1092
        %v1105 = vmul.f32 %v942, %v1092
        %v1106 = vmul.f32 %v943, %v1092
        %v1107 = vmul.f32 %v944, %v1092
        %v1108 = vmul.f32 %v945, %v1092
        %v1125 = vrot.slane %v1093, 1
        %v1126 = vrot.slane %v1094, 1
        %v1127 = vsel %vm501, %v1125, %v1126
        %v1128 = vrot.slane %v1095, 1
        %v1129 = vrot.slane %v1096, 1
        %v1130 = vsel %vm501, %v1128, %v1129
        %v1131 = vrot.slane %v1097, 1
        %v1132 = vrot.slane %v1098, 1
        %v1133 = vsel %vm501, %v1131, %v1132
        %v1134 = vrot.slane %v1099, 1
        %v1135 = vrot.slane %v1100, 1
        %v1136 = vsel %vm501, %v1134, %v1135
        %v1137 = vrot.slane %v1101, 1
        %v1138 = vrot.slane %v1102, 1
        %v1139 = vsel %vm501, %v1137, %v1138
        %v1140 = vrot.slane %v1103, 1
        %v1141 = vrot.slane %v1104, 1
        %v1142 = vsel %vm501, %v1140, %v1141
        %v1143 = vrot.slane %v1105, 1
        %v1144 = vrot.slane %v1106, 1
        %v1145 = vsel %vm501, %v1143, %v1144
        %v1146 = vrot.slane %v1107, 1
        %v1147 = vrot.slane %v1108, 1
        %v1148 = vsel %vm501, %v1146, %v1147
        %v1157 = vadd.f32 %v1080, %v1127
        %v1158 = vadd.f32 %v1081, %v1130
        %v1159 = vadd.f32 %v1082, %v1133
        %v1160 = vadd.f32 %v1083, %v1136
        %v1161 = vadd.f32 %v1084, %v1139
        %v1162 = vadd.f32 %v1085, %v1142
        %v1163 = vadd.f32 %v1086, %v1145
        %v1164 = vadd.f32 %v1087, %v1148
        %v1165 = vld [vmem:[%s3 + $0x10] sm:$0x1]
        %v1166 = vlaneseq
        %v1167 = vshrl.u32 %v1166, 7
        %v1168 = vsub.s32 0, %v1167
        %v1169 = vrot.slane %v1165, %v1168
        %v1170 = vmul.f32 %v932, %v1169
        %v1171 = vmul.f32 %v933, %v1169
        %v1172 = vmul.f32 %v934, %v1169
        %v1173 = vmul.f32 %v935, %v1169
        %v1174 = vmul.f32 %v936, %v1169
        %v1175 = vmul.f32 %v937, %v1169
        %v1176 = vmul.f32 %v938, %v1169
        %v1177 = vmul.f32 %v939, %v1169
        %v1178 = vmul.f32 %v940, %v1169
        %v1179 = vmul.f32 %v941, %v1169
        %v1180 = vmul.f32 %v942, %v1169
        %v1181 = vmul.f32 %v943, %v1169
        %v1182 = vmul.f32 %v944, %v1169
        %v1183 = vmul.f32 %v945, %v1169
        %v1184 = vmul.f32 %v946, %v1169
        %v1185 = vmul.f32 %v947, %v1169
        %v1202 = vrot.slane %v1170, 1
        %v1203 = vrot.slane %v1171, 1
        %v1204 = vsel %vm501, %v1202, %v1203
        %v1205 = vrot.slane %v1172, 1
        %v1206 = vrot.slane %v1173, 1
        %v1207 = vsel %vm501, %v1205, %v1206
        %v1208 = vrot.slane %v1174, 1
        %v1209 = vrot.slane %v1175, 1
        %v1210 = vsel %vm501, %v1208, %v1209
        %v1211 = vrot.slane %v1176, 1
        %v1212 = vrot.slane %v1177, 1
        %v1213 = vsel %vm501, %v1211, %v1212
        %v1214 = vrot.slane %v1178, 1
        %v1215 = vrot.slane %v1179, 1
        %v1216 = vsel %vm501, %v1214, %v1215
        %v1217 = vrot.slane %v1180, 1
        %v1218 = vrot.slane %v1181, 1
        %v1219 = vsel %vm501, %v1217, %v1218
        %v1220 = vrot.slane %v1182, 1
        %v1221 = vrot.slane %v1183, 1
        %v1222 = vsel %vm501, %v1220, %v1221
        %v1223 = vrot.slane %v1184, 1
        %v1224 = vrot.slane %v1185, 1
        %v1225 = vsel %vm501, %v1223, %v1224
        %v1234 = vadd.f32 %v1157, %v1204
        %v1235 = vadd.f32 %v1158, %v1207
        %v1236 = vadd.f32 %v1159, %v1210
        %v1237 = vadd.f32 %v1160, %v1213
        %v1238 = vadd.f32 %v1161, %v1216
        %v1239 = vadd.f32 %v1162, %v1219
        %v1240 = vadd.f32 %v1163, %v1222
        %v1241 = vadd.f32 %v1164, %v1225
        %v1242 = vld [vmem:[%s3 + $0xb] sm:$0x1]
        %v1243 = vlaneseq
        %v1244 = vshrl.u32 %v1243, 7
        %v1245 = vsub.s32 0, %v1244
        %v1246 = vrot.slane %v1242, %v1245
        %v1247 = vmul.f32 %v928, %v1246
        %v1248 = vmul.f32 %v929, %v1246
        %v1249 = vmul.f32 %v930, %v1246
        %v1250 = vmul.f32 %v931, %v1246
        %v1251 = vmul.f32 %v932, %v1246
        %v1252 = vmul.f32 %v933, %v1246
        %v1253 = vmul.f32 %v934, %v1246
        %v1254 = vmul.f32 %v935, %v1246
        %v1255 = vmul.f32 %v936, %v1246
        %v1256 = vmul.f32 %v937, %v1246
        %v1257 = vmul.f32 %v938, %v1246
        %v1258 = vmul.f32 %v939, %v1246
        %v1259 = vmul.f32 %v940, %v1246
        %v1260 = vmul.f32 %v941, %v1246
        %v1261 = vmul.f32 %v942, %v1246
        %v1262 = vmul.f32 %v943, %v1246
        %v1279 = vrot.slane %v1247, 2
        %v1280 = vrot.slane %v1248, 2
        %v1281 = vsel %vm733, %v1279, %v1280
        %v1282 = vrot.slane %v1249, 2
        %v1283 = vrot.slane %v1250, 2
        %v1284 = vsel %vm733, %v1282, %v1283
        %v1285 = vrot.slane %v1251, 2
        %v1286 = vrot.slane %v1252, 2
        %v1287 = vsel %vm733, %v1285, %v1286
        %v1288 = vrot.slane %v1253, 2
        %v1289 = vrot.slane %v1254, 2
        %v1290 = vsel %vm733, %v1288, %v1289
        %v1291 = vrot.slane %v1255, 2
        %v1292 = vrot.slane %v1256, 2
        %v1293 = vsel %vm733, %v1291, %v1292
        %v1294 = vrot.slane %v1257, 2
        %v1295 = vrot.slane %v1258, 2
        %v1296 = vsel %vm733, %v1294, %v1295
        %v1297 = vrot.slane %v1259, 2
        %v1298 = vrot.slane %v1260, 2
        %v1299 = vsel %vm733, %v1297, %v1298
        %v1300 = vrot.slane %v1261, 2
        %v1301 = vrot.slane %v1262, 2
        %v1302 = vsel %vm733, %v1300, %v1301
        %v1311 = vadd.f32 %v1234, %v1281
        %v1312 = vadd.f32 %v1235, %v1284
        %v1313 = vadd.f32 %v1236, %v1287
        %v1314 = vadd.f32 %v1237, %v1290
        %v1315 = vadd.f32 %v1238, %v1293
        %v1316 = vadd.f32 %v1239, %v1296
        %v1317 = vadd.f32 %v1240, %v1299
        %v1318 = vadd.f32 %v1241, %v1302
        %v1319 = vld [vmem:[%s3 + $0xe] sm:$0x1]
        %v1320 = vlaneseq
        %v1321 = vshrl.u32 %v1320, 7
        %v1322 = vsub.s32 0, %v1321
        %v1323 = vrot.slane %v1319, %v1322
        %v1324 = vmul.f32 %v930, %v1323
        %v1325 = vmul.f32 %v931, %v1323
        %v1326 = vmul.f32 %v932, %v1323
        %v1327 = vmul.f32 %v933, %v1323
        %v1328 = vmul.f32 %v934, %v1323
        %v1329 = vmul.f32 %v935, %v1323
        %v1330 = vmul.f32 %v936, %v1323
        %v1331 = vmul.f32 %v937, %v1323
        %v1332 = vmul.f32 %v938, %v1323
        %v1333 = vmul.f32 %v939, %v1323
        %v1334 = vmul.f32 %v940, %v1323
        %v1335 = vmul.f32 %v941, %v1323
        %v1336 = vmul.f32 %v942, %v1323
        %v1337 = vmul.f32 %v943, %v1323
        %v1338 = vmul.f32 %v944, %v1323
        %v1339 = vmul.f32 %v945, %v1323
        %v1356 = vrot.slane %v1324, 2
        %v1357 = vrot.slane %v1325, 2
        %v1358 = vsel %vm733, %v1356, %v1357
        %v1359 = vrot.slane %v1326, 2
        %v1360 = vrot.slane %v1327, 2
        %v1361 = vsel %vm733, %v1359, %v1360
        %v1362 = vrot.slane %v1328, 2
        %v1363 = vrot.slane %v1329, 2
        %v1364 = vsel %vm733, %v1362, %v1363
        %v1365 = vrot.slane %v1330, 2
        %v1366 = vrot.slane %v1331, 2
        %v1367 = vsel %vm733, %v1365, %v1366
        %v1368 = vrot.slane %v1332, 2
        %v1369 = vrot.slane %v1333, 2
        %v1370 = vsel %vm733, %v1368, %v1369
        %v1371 = vrot.slane %v1334, 2
        %v1372 = vrot.slane %v1335, 2
        %v1373 = vsel %vm733, %v1371, %v1372
        %v1374 = vrot.slane %v1336, 2
        %v1375 = vrot.slane %v1337, 2
        %v1376 = vsel %vm733, %v1374, %v1375
        %v1377 = vrot.slane %v1338, 2
        %v1378 = vrot.slane %v1339, 2
        %v1379 = vsel %vm733, %v1377, %v1378
        %v1388 = vadd.f32 %v1311, %v1358
        %v1389 = vadd.f32 %v1312, %v1361
        %v1390 = vadd.f32 %v1313, %v1364
        %v1391 = vadd.f32 %v1314, %v1367
        %v1392 = vadd.f32 %v1315, %v1370
        %v1393 = vadd.f32 %v1316, %v1373
        %v1394 = vadd.f32 %v1317, %v1376
        %v1395 = vadd.f32 %v1318, %v1379
        %v1396 = vld [vmem:[%s3 + $0x11] sm:$0x1]
        %v1397 = vlaneseq
        %v1398 = vshrl.u32 %v1397, 7
        %v1399 = vsub.s32 0, %v1398
        %v1400 = vrot.slane %v1396, %v1399
        %v1401 = vmul.f32 %v932, %v1400
        %v1402 = vmul.f32 %v933, %v1400
        %v1403 = vmul.f32 %v934, %v1400
        %v1404 = vmul.f32 %v935, %v1400
        %v1405 = vmul.f32 %v936, %v1400
        %v1406 = vmul.f32 %v937, %v1400
        %v1407 = vmul.f32 %v938, %v1400
        %v1408 = vmul.f32 %v939, %v1400
        %v1409 = vmul.f32 %v940, %v1400
        %v1410 = vmul.f32 %v941, %v1400
        %v1411 = vmul.f32 %v942, %v1400
        %v1412 = vmul.f32 %v943, %v1400
        %v1413 = vmul.f32 %v944, %v1400
        %v1414 = vmul.f32 %v945, %v1400
        %v1415 = vmul.f32 %v946, %v1400
        %v1416 = vmul.f32 %v947, %v1400
        %v1433 = vrot.slane %v1401, 2
        %v1434 = vrot.slane %v1402, 2
        %v1435 = vsel %vm733, %v1433, %v1434
        %v1436 = vrot.slane %v1403, 2
        %v1437 = vrot.slane %v1404, 2
        %v1438 = vsel %vm733, %v1436, %v1437
        %v1439 = vrot.slane %v1405, 2
        %v1440 = vrot.slane %v1406, 2
        %v1441 = vsel %vm733, %v1439, %v1440
        %v1442 = vrot.slane %v1407, 2
        %v1443 = vrot.slane %v1408, 2
        %v1444 = vsel %vm733, %v1442, %v1443
        %v1445 = vrot.slane %v1409, 2
        %v1446 = vrot.slane %v1410, 2
        %v1447 = vsel %vm733, %v1445, %v1446
        %v1448 = vrot.slane %v1411, 2
        %v1449 = vrot.slane %v1412, 2
        %v1450 = vsel %vm733, %v1448, %v1449
        %v1451 = vrot.slane %v1413, 2
        %v1452 = vrot.slane %v1414, 2
        %v1453 = vsel %vm733, %v1451, %v1452
        %v1454 = vrot.slane %v1415, 2
        %v1455 = vrot.slane %v1416, 2
        %v1456 = vsel %vm733, %v1454, %v1455
        %v1465 = vadd.f32 %v1388, %v1435
        %v1466 = vadd.f32 %v1389, %v1438
        %v1467 = vadd.f32 %v1390, %v1441
        %v1468 = vadd.f32 %v1391, %v1444
        %v1469 = vadd.f32 %v1392, %v1447
        %v1470 = vadd.f32 %v1393, %v1450
        %v1471 = vadd.f32 %v1394, %v1453
        %v1472 = vadd.f32 %v1395, %v1456
        %v1473 = vld [vmem:[%s370] sm:$0xff]
        %v1474 = vld [vmem:[%s370 + $0x8] sm:$0x3]
        %v1475 = vld [vmem:[%s370 + $0x10] sm:$0xff]
        %v1476 = vld [vmem:[%s370 + $0x18] sm:$0x3]
        %v1477 = vld [vmem:[%s370 + $0x20] sm:$0xff]
        %v1478 = vld [vmem:[%s370 + $0x28] sm:$0x3]
        %v1479 = vld [vmem:[%s370 + $0x30] sm:$0xff]
        %v1480 = vld [vmem:[%s370 + $0x38] sm:$0x3]
        %v1481 = vld [vmem:[%s370 + $0x40] sm:$0xff]
        %v1482 = vld [vmem:[%s370 + $0x48] sm:$0x3]
        %v1483 = vld [vmem:[%s370 + $0x50] sm:$0xff]
        %v1484 = vld [vmem:[%s370 + $0x58] sm:$0x3]
        %v1485 = vld [vmem:[%s370 + $0x60] sm:$0xff]
        %v1486 = vld [vmem:[%s370 + $0x68] sm:$0x3]
        %v1487 = vld [vmem:[%s370 + $0x70] sm:$0xff]
        %v1488 = vld [vmem:[%s370 + $0x78] sm:$0x3]
        %v1489 = vld [vmem:[%s370 + $0x80] sm:$0xff]
        %v1490 = vld [vmem:[%s370 + $0x88] sm:$0x3]
        %v1491 = vld [vmem:[%s370 + $0x90] sm:$0xff]
        %v1492 = vld [vmem:[%s370 + $0x98] sm:$0x3]
        %v1493 = vld [vmem:[%s3 + $0x12] sm:$0x1]
        %v1494 = vlaneseq
        %v1495 = vshrl.u32 %v1494, 7
        %v1496 = vsub.s32 0, %v1495
        %v1497 = vrot.slane %v1493, %v1496
        %v1498 = vmul.f32 %v1473, %v1497
        %v1499 = vmul.f32 %v1475, %v1497
        %v1500 = vmul.f32 %v1477, %v1497
        %v1501 = vmul.f32 %v1479, %v1497
        %v1502 = vmul.f32 %v1481, %v1497
        %v1503 = vmul.f32 %v1483, %v1497
        %v1504 = vmul.f32 %v1485, %v1497
        %v1505 = vmul.f32 %v1487, %v1497
        %v1506 = vadd.f32 %v1465, %v1498
        %v1507 = vadd.f32 %v1466, %v1499
        %v1508 = vadd.f32 %v1467, %v1500
        %v1509 = vadd.f32 %v1468, %v1501
        %v1510 = vadd.f32 %v1469, %v1502
        %v1511 = vadd.f32 %v1470, %v1503
        %v1512 = vadd.f32 %v1471, %v1504
        %v1513 = vadd.f32 %v1472, %v1505
        %v1514 = vld [vmem:[%s3 + $0x15] sm:$0x1]
        %v1515 = vlaneseq
        %v1516 = vshrl.u32 %v1515, 7
        %v1517 = vsub.s32 0, %v1516
        %v1518 = vrot.slane %v1514, %v1517
        %v1519 = vmul.f32 %v1475, %v1518
        %v1520 = vmul.f32 %v1477, %v1518
        %v1521 = vmul.f32 %v1479, %v1518
        %v1522 = vmul.f32 %v1481, %v1518
        %v1523 = vmul.f32 %v1483, %v1518
        %v1524 = vmul.f32 %v1485, %v1518
        %v1525 = vmul.f32 %v1487, %v1518
        %v1526 = vmul.f32 %v1489, %v1518
        %v1527 = vadd.f32 %v1506, %v1519
        %v1528 = vadd.f32 %v1507, %v1520
        %v1529 = vadd.f32 %v1508, %v1521
        %v1530 = vadd.f32 %v1509, %v1522
        %v1531 = vadd.f32 %v1510, %v1523
        %v1532 = vadd.f32 %v1511, %v1524
        %v1533 = vadd.f32 %v1512, %v1525
        %v1534 = vadd.f32 %v1513, %v1526
        %v1535 = vld [vmem:[%s3 + $0x18] sm:$0x1]
        %v1536 = vlaneseq
        %v1537 = vshrl.u32 %v1536, 7
        %v1538 = vsub.s32 0, %v1537
        %v1539 = vrot.slane %v1535, %v1538
        %v1540 = vmul.f32 %v1477, %v1539
        %v1541 = vmul.f32 %v1479, %v1539
        %v1542 = vmul.f32 %v1481, %v1539
        %v1543 = vmul.f32 %v1483, %v1539
        %v1544 = vmul.f32 %v1485, %v1539
        %v1545 = vmul.f32 %v1487, %v1539
        %v1546 = vmul.f32 %v1489, %v1539
        %v1547 = vmul.f32 %v1491, %v1539
        %v1548 = vadd.f32 %v1527, %v1540
        %v1549 = vadd.f32 %v1528, %v1541
        %v1550 = vadd.f32 %v1529, %v1542
        %v1551 = vadd.f32 %v1530, %v1543
        %v1552 = vadd.f32 %v1531, %v1544
        %v1553 = vadd.f32 %v1532, %v1545
        %v1554 = vadd.f32 %v1533, %v1546
        %v1555 = vadd.f32 %v1534, %v1547
        %v1556 = vld [vmem:[%s3 + $0x13] sm:$0x1]
        %v1557 = vlaneseq
        %v1558 = vshrl.u32 %v1557, 7
        %v1559 = vsub.s32 0, %v1558
        %v1560 = vrot.slane %v1556, %v1559
        %v1561 = vmul.f32 %v1473, %v1560
        %v1562 = vmul.f32 %v1474, %v1560
        %v1563 = vmul.f32 %v1475, %v1560
        %v1564 = vmul.f32 %v1476, %v1560
        %v1565 = vmul.f32 %v1477, %v1560
        %v1566 = vmul.f32 %v1478, %v1560
        %v1567 = vmul.f32 %v1479, %v1560
        %v1568 = vmul.f32 %v1480, %v1560
        %v1569 = vmul.f32 %v1481, %v1560
        %v1570 = vmul.f32 %v1482, %v1560
        %v1571 = vmul.f32 %v1483, %v1560
        %v1572 = vmul.f32 %v1484, %v1560
        %v1573 = vmul.f32 %v1485, %v1560
        %v1574 = vmul.f32 %v1486, %v1560
        %v1575 = vmul.f32 %v1487, %v1560
        %v1576 = vmul.f32 %v1488, %v1560
        %v1593 = vrot.slane %v1561, 1
        %v1594 = vrot.slane %v1562, 1
        %v1595 = vsel %vm501, %v1593, %v1594
        %v1596 = vrot.slane %v1563, 1
        %v1597 = vrot.slane %v1564, 1
        %v1598 = vsel %vm501, %v1596, %v1597
        %v1599 = vrot.slane %v1565, 1
        %v1600 = vrot.slane %v1566, 1
        %v1601 = vsel %vm501, %v1599, %v1600
        %v1602 = vrot.slane %v1567, 1
        %v1603 = vrot.slane %v1568, 1
        %v1604 = vsel %vm501, %v1602, %v1603
        %v1605 = vrot.slane %v1569, 1
        %v1606 = vrot.slane %v1570, 1
        %v1607 = vsel %vm501, %v1605, %v1606
        %v1608 = vrot.slane %v1571, 1
        %v1609 = vrot.slane %v1572, 1
        %v1610 = vsel %vm501, %v1608, %v1609
        %v1611 = vrot.slane %v1573, 1
        %v1612 = vrot.slane %v1574, 1
        %v1613 = vsel %vm501, %v1611, %v1612
        %v1614 = vrot.slane %v1575, 1
        %v1615 = vrot.slane %v1576, 1
        %v1616 = vsel %vm501, %v1614, %v1615
        %v1625 = vadd.f32 %v1548, %v1595
        %v1626 = vadd.f32 %v1549, %v1598
        %v1627 = vadd.f32 %v1550, %v1601
        %v1628 = vadd.f32 %v1551, %v1604
        %v1629 = vadd.f32 %v1552, %v1607
        %v1630 = vadd.f32 %v1553, %v1610
        %v1631 = vadd.f32 %v1554, %v1613
        %v1632 = vadd.f32 %v1555, %v1616
        %v1633 = vld [vmem:[%s3 + $0x16] sm:$0x1]
        %v1634 = vlaneseq
        %v1635 = vshrl.u32 %v1634, 7
        %v1636 = vsub.s32 0, %v1635
        %v1637 = vrot.slane %v1633, %v1636
        %v1638 = vmul.f32 %v1475, %v1637
        %v1639 = vmul.f32 %v1476, %v1637
        %v1640 = vmul.f32 %v1477, %v1637
        %v1641 = vmul.f32 %v1478, %v1637
        %v1642 = vmul.f32 %v1479, %v1637
        %v1643 = vmul.f32 %v1480, %v1637
        %v1644 = vmul.f32 %v1481, %v1637
        %v1645 = vmul.f32 %v1482, %v1637
        %v1646 = vmul.f32 %v1483, %v1637
        %v1647 = vmul.f32 %v1484, %v1637
        %v1648 = vmul.f32 %v1485, %v1637
        %v1649 = vmul.f32 %v1486, %v1637
        %v1650 = vmul.f32 %v1487, %v1637
        %v1651 = vmul.f32 %v1488, %v1637
        %v1652 = vmul.f32 %v1489, %v1637
        %v1653 = vmul.f32 %v1490, %v1637
        %v1670 = vrot.slane %v1638, 1
        %v1671 = vrot.slane %v1639, 1
        %v1672 = vsel %vm501, %v1670, %v1671
        %v1673 = vrot.slane %v1640, 1
        %v1674 = vrot.slane %v1641, 1
        %v1675 = vsel %vm501, %v1673, %v1674
        %v1676 = vrot.slane %v1642, 1
        %v1677 = vrot.slane %v1643, 1
        %v1678 = vsel %vm501, %v1676, %v1677
        %v1679 = vrot.slane %v1644, 1
        %v1680 = vrot.slane %v1645, 1
        %v1681 = vsel %vm501, %v1679, %v1680
        %v1682 = vrot.slane %v1646, 1
        %v1683 = vrot.slane %v1647, 1
        %v1684 = vsel %vm501, %v1682, %v1683
        %v1685 = vrot.slane %v1648, 1
        %v1686 = vrot.slane %v1649, 1
        %v1687 = vsel %vm501, %v1685, %v1686
        %v1688 = vrot.slane %v1650, 1
        %v1689 = vrot.slane %v1651, 1
        %v1690 = vsel %vm501, %v1688, %v1689
        %v1691 = vrot.slane %v1652, 1
        %v1692 = vrot.slane %v1653, 1
        %v1693 = vsel %vm501, %v1691, %v1692
        %v1702 = vadd.f32 %v1625, %v1672
        %v1703 = vadd.f32 %v1626, %v1675
        %v1704 = vadd.f32 %v1627, %v1678
        %v1705 = vadd.f32 %v1628, %v1681
        %v1706 = vadd.f32 %v1629, %v1684
        %v1707 = vadd.f32 %v1630, %v1687
        %v1708 = vadd.f32 %v1631, %v1690
        %v1709 = vadd.f32 %v1632, %v1693
        %v1710 = vld [vmem:[%s3 + $0x19] sm:$0x1]
        %v1711 = vlaneseq
        %v1712 = vshrl.u32 %v1711, 7
        %v1713 = vsub.s32 0, %v1712
        %v1714 = vrot.slane %v1710, %v1713
        %v1715 = vmul.f32 %v1477, %v1714
        %v1716 = vmul.f32 %v1478, %v1714
        %v1717 = vmul.f32 %v1479, %v1714
        %v1718 = vmul.f32 %v1480, %v1714
        %v1719 = vmul.f32 %v1481, %v1714
        %v1720 = vmul.f32 %v1482, %v1714
        %v1721 = vmul.f32 %v1483, %v1714
        %v1722 = vmul.f32 %v1484, %v1714
        %v1723 = vmul.f32 %v1485, %v1714
        %v1724 = vmul.f32 %v1486, %v1714
        %v1725 = vmul.f32 %v1487, %v1714
        %v1726 = vmul.f32 %v1488, %v1714
        %v1727 = vmul.f32 %v1489, %v1714
        %v1728 = vmul.f32 %v1490, %v1714
        %v1729 = vmul.f32 %v1491, %v1714
        %v1730 = vmul.f32 %v1492, %v1714
        %v1747 = vrot.slane %v1715, 1
        %v1748 = vrot.slane %v1716, 1
        %v1749 = vsel %vm501, %v1747, %v1748
        %v1750 = vrot.slane %v1717, 1
        %v1751 = vrot.slane %v1718, 1
        %v1752 = vsel %vm501, %v1750, %v1751
        %v1753 = vrot.slane %v1719, 1
        %v1754 = vrot.slane %v1720, 1
        %v1755 = vsel %vm501, %v1753, %v1754
        %v1756 = vrot.slane %v1721, 1
        %v1757 = vrot.slane %v1722, 1
        %v1758 = vsel %vm501, %v1756, %v1757
        %v1759 = vrot.slane %v1723, 1
        %v1760 = vrot.slane %v1724, 1
        %v1761 = vsel %vm501, %v1759, %v1760
        %v1762 = vrot.slane %v1725, 1
        %v1763 = vrot.slane %v1726, 1
        %v1764 = vsel %vm501, %v1762, %v1763
        %v1765 = vrot.slane %v1727, 1
        %v1766 = vrot.slane %v1728, 1
        %v1767 = vsel %vm501, %v1765, %v1766
        %v1768 = vrot.slane %v1729, 1
        %v1769 = vrot.slane %v1730, 1
        %v1770 = vsel %vm501, %v1768, %v1769
        %v1779 = vadd.f32 %v1702, %v1749
        %v1780 = vadd.f32 %v1703, %v1752
        %v1781 = vadd.f32 %v1704, %v1755
        %v1782 = vadd.f32 %v1705, %v1758
        %v1783 = vadd.f32 %v1706, %v1761
        %v1784 = vadd.f32 %v1707, %v1764
        %v1785 = vadd.f32 %v1708, %v1767
        %v1786 = vadd.f32 %v1709, %v1770
        %v1787 = vld [vmem:[%s3 + $0x14] sm:$0x1]
        %v1788 = vlaneseq
        %v1789 = vshrl.u32 %v1788, 7
        %v1790 = vsub.s32 0, %v1789
        %v1791 = vrot.slane %v1787, %v1790
        %v1792 = vmul.f32 %v1473, %v1791
        %v1793 = vmul.f32 %v1474, %v1791
        %v1794 = vmul.f32 %v1475, %v1791
        %v1795 = vmul.f32 %v1476, %v1791
        %v1796 = vmul.f32 %v1477, %v1791
        %v1797 = vmul.f32 %v1478, %v1791
        %v1798 = vmul.f32 %v1479, %v1791
        %v1799 = vmul.f32 %v1480, %v1791
        %v1800 = vmul.f32 %v1481, %v1791
        %v1801 = vmul.f32 %v1482, %v1791
        %v1802 = vmul.f32 %v1483, %v1791
        %v1803 = vmul.f32 %v1484, %v1791
        %v1804 = vmul.f32 %v1485, %v1791
        %v1805 = vmul.f32 %v1486, %v1791
        %v1806 = vmul.f32 %v1487, %v1791
        %v1807 = vmul.f32 %v1488, %v1791
        %v1824 = vrot.slane %v1792, 2
        %v1825 = vrot.slane %v1793, 2
        %v1826 = vsel %vm733, %v1824, %v1825
        %v1827 = vrot.slane %v1794, 2
        %v1828 = vrot.slane %v1795, 2
        %v1829 = vsel %vm733, %v1827, %v1828
        %v1830 = vrot.slane %v1796, 2
        %v1831 = vrot.slane %v1797, 2
        %v1832 = vsel %vm733, %v1830, %v1831
        %v1833 = vrot.slane %v1798, 2
        %v1834 = vrot.slane %v1799, 2
        %v1835 = vsel %vm733, %v1833, %v1834
        %v1836 = vrot.slane %v1800, 2
        %v1837 = vrot.slane %v1801, 2
        %v1838 = vsel %vm733, %v1836, %v1837
        %v1839 = vrot.slane %v1802, 2
        %v1840 = vrot.slane %v1803, 2
        %v1841 = vsel %vm733, %v1839, %v1840
        %v1842 = vrot.slane %v1804, 2
        %v1843 = vrot.slane %v1805, 2
        %v1844 = vsel %vm733, %v1842, %v1843
        %v1845 = vrot.slane %v1806, 2
        %v1846 = vrot.slane %v1807, 2
        %v1847 = vsel %vm733, %v1845, %v1846
        %v1856 = vadd.f32 %v1779, %v1826
        %v1857 = vadd.f32 %v1780, %v1829
        %v1858 = vadd.f32 %v1781, %v1832
        %v1859 = vadd.f32 %v1782, %v1835
        %v1860 = vadd.f32 %v1783, %v1838
        %v1861 = vadd.f32 %v1784, %v1841
        %v1862 = vadd.f32 %v1785, %v1844
        %v1863 = vadd.f32 %v1786, %v1847
        %v1864 = vld [vmem:[%s3 + $0x17] sm:$0x1]
        %v1865 = vlaneseq
        %v1866 = vshrl.u32 %v1865, 7
        %v1867 = vsub.s32 0, %v1866
        %v1868 = vrot.slane %v1864, %v1867
        %v1869 = vmul.f32 %v1475, %v1868
        %v1870 = vmul.f32 %v1476, %v1868
        %v1871 = vmul.f32 %v1477, %v1868
        %v1872 = vmul.f32 %v1478, %v1868
        %v1873 = vmul.f32 %v1479, %v1868
        %v1874 = vmul.f32 %v1480, %v1868
        %v1875 = vmul.f32 %v1481, %v1868
        %v1876 = vmul.f32 %v1482, %v1868
        %v1877 = vmul.f32 %v1483, %v1868
        %v1878 = vmul.f32 %v1484, %v1868
        %v1879 = vmul.f32 %v1485, %v1868
        %v1880 = vmul.f32 %v1486, %v1868
        %v1881 = vmul.f32 %v1487, %v1868
        %v1882 = vmul.f32 %v1488, %v1868
        %v1883 = vmul.f32 %v1489, %v1868
        %v1884 = vmul.f32 %v1490, %v1868
        %v1901 = vrot.slane %v1869, 2
        %v1902 = vrot.slane %v1870, 2
        %v1903 = vsel %vm733, %v1901, %v1902
        %v1904 = vrot.slane %v1871, 2
        %v1905 = vrot.slane %v1872, 2
        %v1906 = vsel %vm733, %v1904, %v1905
        %v1907 = vrot.slane %v1873, 2
        %v1908 = vrot.slane %v1874, 2
        %v1909 = vsel %vm733, %v1907, %v1908
        %v1910 = vrot.slane %v1875, 2
        %v1911 = vrot.slane %v1876, 2
        %v1912 = vsel %vm733, %v1910, %v1911
        %v1913 = vrot.slane %v1877, 2
        %v1914 = vrot.slane %v1878, 2
        %v1915 = vsel %vm733, %v1913, %v1914
        %v1916 = vrot.slane %v1879, 2
        %v1917 = vrot.slane %v1880, 2
        %v1918 = vsel %vm733, %v1916, %v1917
        %v1919 = vrot.slane %v1881, 2
        %v1920 = vrot.slane %v1882, 2
        %v1921 = vsel %vm733, %v1919, %v1920
        %v1922 = vrot.slane %v1883, 2
        %v1923 = vrot.slane %v1884, 2
        %v1924 = vsel %vm733, %v1922, %v1923
        %v1933 = vadd.f32 %v1856, %v1903
        %v1934 = vadd.f32 %v1857, %v1906
        %v1935 = vadd.f32 %v1858, %v1909
        %v1936 = vadd.f32 %v1859, %v1912
        %v1937 = vadd.f32 %v1860, %v1915
        %v1938 = vadd.f32 %v1861, %v1918
        %v1939 = vadd.f32 %v1862, %v1921
        %v1940 = vadd.f32 %v1863, %v1924
        %v1941 = vld [vmem:[%s3 + $0x1a] sm:$0x1]
        %v1942 = vlaneseq
        %v1943 = vshrl.u32 %v1942, 7
        %v1944 = vsub.s32 0, %v1943
        %v1945 = vrot.slane %v1941, %v1944
        %v1946 = vmul.f32 %v1477, %v1945
        %v1947 = vmul.f32 %v1478, %v1945
        %v1948 = vmul.f32 %v1479, %v1945
        %v1949 = vmul.f32 %v1480, %v1945
        %v1950 = vmul.f32 %v1481, %v1945
        %v1951 = vmul.f32 %v1482, %v1945
        %v1952 = vmul.f32 %v1483, %v1945
        %v1953 = vmul.f32 %v1484, %v1945
        %v1954 = vmul.f32 %v1485, %v1945
        %v1955 = vmul.f32 %v1486, %v1945
        %v1956 = vmul.f32 %v1487, %v1945
        %v1957 = vmul.f32 %v1488, %v1945
        %v1958 = vmul.f32 %v1489, %v1945
        %v1959 = vmul.f32 %v1490, %v1945
        %v1960 = vmul.f32 %v1491, %v1945
        %v1961 = vmul.f32 %v1492, %v1945
        %v1978 = vrot.slane %v1946, 2
        %v1979 = vrot.slane %v1947, 2
        %v1980 = vsel %vm733, %v1978, %v1979
        %v1981 = vrot.slane %v1948, 2
        %v1982 = vrot.slane %v1949, 2
        %v1983 = vsel %vm733, %v1981, %v1982
        %v1984 = vrot.slane %v1950, 2
        %v1985 = vrot.slane %v1951, 2
        %v1986 = vsel %vm733, %v1984, %v1985
        %v1987 = vrot.slane %v1952, 2
        %v1988 = vrot.slane %v1953, 2
        %v1989 = vsel %vm733, %v1987, %v1988
        %v1990 = vrot.slane %v1954, 2
        %v1991 = vrot.slane %v1955, 2
        %v1992 = vsel %vm733, %v1990, %v1991
        %v1993 = vrot.slane %v1956, 2
        %v1994 = vrot.slane %v1957, 2
        %v1995 = vsel %vm733, %v1993, %v1994
        %v1996 = vrot.slane %v1958, 2
        %v1997 = vrot.slane %v1959, 2
        %v1998 = vsel %vm733, %v1996, %v1997
        %v1999 = vrot.slane %v1960, 2
        %v2000 = vrot.slane %v1961, 2
        %v2001 = vsel %vm733, %v1999, %v2000
        %v2010 = vadd.f32 %v1933, %v1980
        %v2011 = vadd.f32 %v1934, %v1983
        %v2012 = vadd.f32 %v1935, %v1986
        %v2013 = vadd.f32 %v1936, %v1989
        %v2014 = vadd.f32 %v1937, %v1992
        %v2015 = vadd.f32 %v1938, %v1995
        %v2016 = vadd.f32 %v1939, %v1998
        %v2017 = vadd.f32 %v1940, %v2001
        %v2018 = vld [vmem:[%s4] sm:$0x1]
        %v2020 = vlaneseq
        %v2021 = vshrl.u32 %v2020, 7
        %v2022 = vsub.s32 0, %v2021
        %v2023 = vrot.slane %v2018, %v2022
        %v2025 = vadd.f32 %v2010, %v2023
        %v2026 = vadd.f32 %v2011, %v2023
        %v2027 = vadd.f32 %v2012, %v2023
        %v2028 = vadd.f32 %v2013, %v2023
        %v2029 = vadd.f32 %v2014, %v2023
        %v2030 = vadd.f32 %v2015, %v2023
        %v2031 = vadd.f32 %v2016, %v2023
        %v2032 = vadd.f32 %v2017, %v2023
        %vm2033 = vcmask 31744
        %2034 = vst.msk [vmem:[%s380] sm:$0xff] %vm2033, %v2025
        %2035 = vst.msk [vmem:[%s380 + $0x8] sm:$0xff] %vm2033, %v2026
        %2036 = vst.msk [vmem:[%s380 + $0x10] sm:$0xff] %vm2033, %v2027
        %2037 = vst.msk [vmem:[%s380 + $0x18] sm:$0xff] %vm2033, %v2028
        %2038 = vst.msk [vmem:[%s380 + $0x20] sm:$0xff] %vm2033, %v2029
        %2039 = vst.msk [vmem:[%s380 + $0x28] sm:$0xff] %vm2033, %v2030
        %2040 = vst.msk [vmem:[%s380 + $0x30] sm:$0xff] %vm2033, %v2031
        %2041 = vst.msk [vmem:[%s380 + $0x38] sm:$0xff] %vm2033, %v2032
        %p2042 = scmp.eq.s32.totalorder %s26, 0
        // Predicated region
        $region41: #{tpu_custom_call.1} parent=39 // pred_check
          %p2043 = pneg %p2042
        $region42: #{tpu_custom_call.1} parent=39 // pred_check_branch
          %2045 = sbr.rel (%p2043) target = $region44
        $region43: #{tpu_custom_call.1} parent=39 // pred_region
          %vm2046 = vcmask 25600
          %2047 = vst.msk [vmem:[%s340] sm:$0x3] %vm2046, 0.0
        $region44: #{tpu_custom_call.1} parent=39 // pred_fallthru
          _
        %v2048 = vsel %vm2033, %v2025, 0.0
        %v2049 = vsel %vm2033, %v2026, 0.0
        %v2050 = vadd.f32 %v2048, %v2049
        %v2051 = vsel %vm2033, %v2027, 0.0
        %v2052 = vadd.f32 %v2050, %v2051
        %v2053 = vsel %vm2033, %v2028, 0.0
        %v2054 = vadd.f32 %v2052, %v2053
        %v2055 = vsel %vm2033, %v2029, 0.0
        %v2056 = vadd.f32 %v2054, %v2055
        %v2057 = vsel %vm2033, %v2030, 0.0
        %v2058 = vadd.f32 %v2056, %v2057
        %v2059 = vsel %vm2033, %v2031, 0.0
        %v2060 = vadd.f32 %v2058, %v2059
        %v2061 = vsel %vm2033, %v2032, 0.0
        %v2062 = vadd.f32 %v2060, %v2061
        %v2063 = vrot.slane %v2062, 4
        %v2064 = vadd.f32 %v2062, %v2063
        %v2065 = vrot.slane %v2064, 2
        %v2066 = vadd.f32 %v2064, %v2065
        %v2067 = vrot.slane %v2066, 1
        %v2068 = vadd.f32 %v2066, %v2067
        %v2069 = vmul.f32 %v2025, %v2025
        %v2070 = vmul.f32 %v2026, %v2026
        %v2071 = vmul.f32 %v2027, %v2027
        %v2072 = vmul.f32 %v2028, %v2028
        %v2073 = vmul.f32 %v2029, %v2029
        %v2074 = vmul.f32 %v2030, %v2030
        %v2075 = vmul.f32 %v2031, %v2031
        %v2076 = vmul.f32 %v2032, %v2032
        %v2077 = vsel %vm2033, %v2069, 0.0
        %v2078 = vsel %vm2033, %v2070, 0.0
        %v2079 = vadd.f32 %v2077, %v2078
        %v2080 = vsel %vm2033, %v2071, 0.0
        %v2081 = vadd.f32 %v2079, %v2080
        %v2082 = vsel %vm2033, %v2072, 0.0
        %v2083 = vadd.f32 %v2081, %v2082
        %v2084 = vsel %vm2033, %v2073, 0.0
        %v2085 = vadd.f32 %v2083, %v2084
        %v2086 = vsel %vm2033, %v2074, 0.0
        %v2087 = vadd.f32 %v2085, %v2086
        %v2088 = vsel %vm2033, %v2075, 0.0
        %v2089 = vadd.f32 %v2087, %v2088
        %v2090 = vsel %vm2033, %v2076, 0.0
        %v2091 = vadd.f32 %v2089, %v2090
        %v2092 = vrot.slane %v2091, 4
        %v2093 = vadd.f32 %v2091, %v2092
        %v2094 = vrot.slane %v2093, 2
        %v2095 = vadd.f32 %v2093, %v2094
        %v2096 = vrot.slane %v2095, 1
        %v2097 = vadd.f32 %v2095, %v2096
        %v2098 = vld [vmem:[%s340] sm:$0x1]
        %v2099 = vadd.f32 %v2098, %v2068
        %vm2100 = vcmask 24576
        %2101 = vst.msk [vmem:[%s340] sm:$0x1] %vm2100, %v2099
        %v2102 = vld [vmem:[%s340 + $0x1] sm:$0x1]
        %v2103 = vadd.f32 %v2102, %v2097
        %2104 = vst.msk [vmem:[%s340 + $0x1] sm:$0x1] %vm2100, %v2103
        %p2105 = scmp.lt.s32.totalorder %s25, 1
        %s2106 = scalar_select %p2105, %s25, 1
        %p2107 = scmp.lt.s32.totalorder %s26, 7
        %s2108 = scalar_select %p2107, %s26, 7
        %s2109 = smul.addr %s2108, 8
        %s2110 = smul.addr %s2106, 64
        %s2111 = sadd.s32 %s2109, %s2110
        %s2112 = smul.addr %s2111, 8
        %s2113 = scalar_lea.vmem %s5, %s2112
        %s2114 = sand.u32 %s199, 1
        %s2115 = scalar_lea.sflag [#allocation3], %s2114
        %s2116 = sand.u32 %s199, 1
        %s2117 = smul.addr %s2116, 2
        %s2118 = scalar_lea.vmem [#allocation2], %s2117
        // Predicated region
        $region45: #{tpu_custom_call.1} parent=39 // pred_check
          %p2119 = pneg %p183
        $region46: #{tpu_custom_call.1} parent=39 // pred_check_branch
          %2121 = sbr.rel (%p2119) target = $region48
        $region47: #{tpu_custom_call.1} parent=39 // pred_region
          _
        $region48: #{tpu_custom_call.1} parent=39 // pred_fallthru
          _
        // Predicated region
        $region49: #{tpu_custom_call.1} parent=39 // pred_check
          %p2122 = pneg %p209
        $region50: #{tpu_custom_call.1} parent=39 // pred_check_branch
          %2124 = sbr.rel (%p2122) target = $region52
        $region51: #{tpu_custom_call.1} parent=39 // pred_region
          %s2126 = ssub.s32 32, 32
          %2127 = vsyncadd %s2115, %s2126
          %s2128 = smul.addr %s25, 32
          %s2129 = scalar_lea.hbm %s6, %s2128
          %s2131 = sshll.u32 %s2118, 4
          %s2132 = int_to_ptr.vmem [resolvable:$true] %s2131
          %2134 = dma.vmem_to_hbm [thread:$0]  %s2132, 32, %s2129, %s2115
        $region52: #{tpu_custom_call.1} parent=39 // pred_fallthru
          _
      $region40: #{tpu_custom_call.1} parent=5 // pred_fallthru
        _
      %p2135 = scmp.le.s32.totalorder 2, %s16
      // Predicated region
      $region53: #{tpu_custom_call.1} parent=5 // pred_check
        %p2136 = pneg %p2135
      $region54: #{tpu_custom_call.1} parent=5 // pred_check_branch
        %2138 = sbr.rel (%p2136) target = $region56
      $region55: #{tpu_custom_call.1} parent=5 // pred_region
        %s2139 = ssub.s32 %s16, 2
        // Predicated region
        $region57: #{tpu_custom_call.1} parent=55 // pred_check
          %p2140 = pneg %p189
        $region58: #{tpu_custom_call.1} parent=55 // pred_check_branch
          %2142 = sbr.rel (%p2140) target = $region60
        $region59: #{tpu_custom_call.1} parent=55 // pred_region
          %p2143 = scmp.lt.s32.totalorder %s27, 1
          %s2144 = scalar_select %p2143, %s27, 1
          %p2145 = scmp.lt.s32.totalorder %s28, 7
          %s2146 = scalar_select %p2145, %s28, 7
          %s2147 = smul.addr %s2146, 8
          %s2148 = smul.addr %s2144, 64
          %s2149 = sadd.s32 %s2147, %s2148
          %s2150 = smul.addr %s2149, 8
          %s2151 = scalar_lea.vmem %s5, %s2150
        $region60: #{tpu_custom_call.1} parent=55 // pred_fallthru
          _
        // Predicated region
        $region61: #{tpu_custom_call.1} parent=55 // pred_check
          %p2152 = pneg %p215
        $region62: #{tpu_custom_call.1} parent=55 // pred_check_branch
          %2154 = sbr.rel (%p2152) target = $region64
        $region63: #{tpu_custom_call.1} parent=55 // pred_region
          %s2155 = sand.u32 %s200, 1
          %s2156 = scalar_lea.sflag [#allocation3], %s2155
          %s2157 = sand.u32 %s200, 1
          %s2158 = smul.addr %s2157, 2
          %s2159 = scalar_lea.vmem [#allocation2], %s2158
          %2160 = dma.done %s2156, 32
        $region64: #{tpu_custom_call.1} parent=55 // pred_fallthru
          _
      $region56: #{tpu_custom_call.1} parent=5 // pred_fallthru
        _
    $region6: #{tpu_custom_call.1} parent=1 // loop_footer
      %s20 = sadd.s32 1, %s16
    $region7: #{tpu_custom_call.1} parent=1 // loop_footer_branch
      %15 = sbr.rel target = $region3
    $region8: #{tpu_custom_call.1} parent=1 // loop_exit
      _
    %2161 = vsyncpa [#allocation3], 1
    %s2162 = scalar_lea.sflag [#allocation3], 1
    %2163 = vsyncpa %s2162, 1

</llo_original>
